<compile_context>
chip_gen: v5e
topology: v5e:2x2
jax: 0.10.0
libtpu: 0.0.40
codegen_flags: <defaults>
</compile_context>

<pallas_src>
import numpy as np
import jax
import jax.numpy as jnp
from jax.experimental import pallas as pl
from jax.experimental.pallas import tpu as pltpu


# ----------------------------- config ---------------------------------------
SR = 22050
WIN_LENGTH = 1024
HOP_LENGTH = 256
N_FFT = 1024
F_MIN = 0.0
F_MAX = 8000.0
N_MELS = 80
CLAMP_MIN = 1e-5

N_FREQS = N_FFT // 2 + 1            # 513 (onesided STFT bins)
N_CHUNKS = N_FFT // HOP_LENGTH      # 4 hop-sized chunks per frame


def _round_up(x, m):
    return ((x + m - 1) // m) * m


def _cdiv(a, b):
    return -(-a // b)


# ------------------- deterministic parameter construction -------------------
def _hz_to_mel_slaney(f):
    f = np.asarray(f, dtype=np.float64)
    f_sp = 200.0 / 3.0
    mels = f / f_sp
    min_log_hz = 1000.0
    min_log_mel = min_log_hz / f_sp
    logstep = np.log(6.4) / 27.0
    return np.where(f >= min_log_hz,
                    min_log_mel + np.log(np.maximum(f, 1e-10) / min_log_hz) / logstep,
                    mels)


def _mel_to_hz_slaney(m):
    m = np.asarray(m, dtype=np.float64)
    f_sp = 200.0 / 3.0
    freqs = m * f_sp
    min_log_hz = 1000.0
    min_log_mel = min_log_hz / f_sp
    logstep = np.log(6.4) / 27.0
    return np.where(m >= min_log_mel,
                    min_log_hz * np.exp(logstep * (m - min_log_mel)),
                    freqs)


def make_mel_filterbank(sr=SR, n_fft=N_FFT, n_mels=N_MELS, fmin=F_MIN, fmax=F_MAX):
    """librosa.filters.mel (Slaney scale, slaney norm). Returns [n_mels, n_freqs]."""
    n_freqs = n_fft // 2 + 1
    fftfreqs = np.linspace(0.0, sr / 2.0, n_freqs)
    mel_pts = np.linspace(_hz_to_mel_slaney(fmin), _hz_to_mel_slaney(fmax), n_mels + 2)
    mel_f = _mel_to_hz_slaney(mel_pts)                          # [n_mels + 2]
    fdiff = np.diff(mel_f)                                      # [n_mels + 1]
    ramps = mel_f[:, None] - fftfreqs[None, :]                  # [n_mels + 2, n_freqs]
    lower = -ramps[:-2] / fdiff[:-1, None]
    upper = ramps[2:] / fdiff[1:, None]
    weights = np.maximum(0.0, np.minimum(lower, upper))
    enorm = 2.0 / (mel_f[2:n_mels + 2] - mel_f[:n_mels])        # slaney norm
    weights *= enorm[:, None]
    return weights.astype(np.float32)                           # [n_mels, n_freqs]


def make_dft_matrices(n_fft=N_FFT, win_length=WIN_LENGTH):
    """Windowed real-DFT matrices [n_fft, n_freqs] (periodic hann folded in)."""
    n = np.arange(n_fft, dtype=np.float64)
    k = np.arange(N_FREQS, dtype=np.float64)
    window = 0.5 * (1.0 - np.cos(2.0 * np.pi * np.arange(win_length) / win_length))
    angle = 2.0 * np.pi * np.outer(n, k) / n_fft                # [n_fft, n_freqs]
    w_re = (window[:, None] * np.cos(angle)).astype(np.float32)
    w_im = (window[:, None] * -np.sin(angle)).astype(np.float32)
    return w_re, w_im


# ------------------------------ Pallas kernel --------------------------------
def mel_kernel(rows_ref, w_ref, melfb_ref, out_ref):
    # rows_ref:  [1, TM + N_CHUNKS - 1, HOP]   f32  (hop-sized rows, +3 overlap)
    # w_ref:     [N_CHUNKS, HOP, 2*NF]          bf16 (re | im fused windowed DFT)
    # melfb_ref: [NF, NMEL_pad]                 bf16
    # out_ref:   [TM, NMEL_pad]                 f32
    tm = out_ref.shape[0]
    nf = melfb_ref.shape[0]
    rows = rows_ref[0]                                           # [TM+3, HOP]

    # frames[f] = concat_c rows[f+c]  =>  frames @ W = sum_c rows[f+c] @ W_c
    y = jnp.zeros((tm, 2 * nf), dtype=jnp.float32)
    for c in range(N_CHUNKS):                                    # unrolled, 4 MXU matmuls
        frag = rows[c:c + tm, :].astype(jnp.bfloat16)            # shifted row window
        y = y + jnp.dot(frag, w_ref[c], preferred_element_type=jnp.float32)

    re = y[:, :nf]
    im = y[:, nf:]
    mag = jnp.sqrt(re * re + im * im)                            # power = 1.0
    mel = jnp.dot(mag.astype(jnp.bfloat16), melfb_ref[...],
                  preferred_element_type=jnp.float32)            # [TM, NMEL_pad]
    out_ref[...] = jnp.log(jnp.maximum(mel, CLAMP_MIN))


def mel_spectrogram(audio: jax.Array) -> jax.Array:
    """audio: [B, T] float32 -> [B, n_mels, T // hop_length] float32."""
    B, T = audio.shape
    n_out = T // HOP_LENGTH                      # forward slices to T // hop frames

    # --- glue: reflect-pad (center=True), view as hop-sized rows --------------
    pad = N_FFT // 2
    padded = jnp.pad(audio, ((0, 0), (pad, pad)), mode="reflect")    # [B, T + n_fft]

    # Per-batch frame tiling (frames never cross batch boundaries).
    TM = max(8, min(512, _round_up(n_out, 8)))
    n_tiles = _cdiv(n_out, TM)
    ROWS_T = TM + N_CHUNKS - 1                   # rows needed per tile of TM frames
    rows_needed = n_tiles * TM + N_CHUNKS - 1
    total = rows_needed * HOP_LENGTH
    if total > padded.shape[1]:                  # zero-pad for the (dropped) tail frames
        padded = jnp.pad(padded, ((0, 0), (0, total - padded.shape[1])))
    rows = padded[:, :total].reshape(B, rows_needed, HOP_LENGTH)

    # Overlapped per-tile windows: only (N_CHUNKS-1) extra rows per TM frames
    # (~0.6% HBM overhead) instead of materializing the 4x frames matrix.
    tiles = jnp.stack([rows[:, t * TM: t * TM + ROWS_T, :] for t in range(n_tiles)],
                      axis=1)                                        # [B, n_tiles, ROWS_T, HOP]
    tiles = tiles.reshape(B * n_tiles, ROWS_T, HOP_LENGTH)           # keep f32 (aligned in-kernel)

    # --- deterministic weights: fused windowed DFT + mel filterbank ----------
    w_re_np, w_im_np = make_dft_matrices()
    mel_np = make_mel_filterbank()                                   # [n_mels, n_freqs]

    # Truncate the frequency axis to the last nonzero filterbank bin (rounded
    # up to a lane multiple); bins above f_max never contribute -> identical.
    nz_cols = np.nonzero(np.any(mel_np != 0.0, axis=0))[0]
    NF = _round_up(int(nz_cols[-1]) + 1, 128)                        # 384 for this config
    if NF <= N_FREQS:
        w_re_t, w_im_t, mel_t = w_re_np[:, :NF], w_im_np[:, :NF], mel_np[:, :NF]
    else:
        pc = NF - N_FREQS
        w_re_t = np.pad(w_re_np, ((0, 0), (0, pc)))
        w_im_t = np.pad(w_im_np, ((0, 0), (0, pc)))
        mel_t = np.pad(mel_np, ((0, 0), (0, pc)))

    NMEL_pad = _round_up(N_MELS, 128)                                # 80 -> 128
    w_comb = np.concatenate([w_re_t, w_im_t], axis=1)                # [n_fft, 2*NF]
    w_chunks = jnp.asarray(w_comb.reshape(N_CHUNKS, HOP_LENGTH, 2 * NF),
                           dtype=jnp.bfloat16)                       # [4, HOP, 2*NF]
    mel_fb = jnp.asarray(np.pad(mel_t.T, ((0, 0), (0, NMEL_pad - N_MELS))),
                         dtype=jnp.bfloat16)                         # [NF, NMEL_pad]

    out = pl.pallas_call(
        mel_kernel,
        out_shape=jax.ShapeDtypeStruct((B * n_tiles * TM, NMEL_pad), jnp.float32),
        grid=(B * n_tiles,),
        in_specs=[
            pl.BlockSpec((1, ROWS_T, HOP_LENGTH), lambda i: (i, 0, 0)),
            pl.BlockSpec((N_CHUNKS, HOP_LENGTH, 2 * NF), lambda i: (0, 0, 0)),
            pl.BlockSpec((NF, NMEL_pad), lambda i: (0, 0)),
        ],
        out_specs=pl.BlockSpec((TM, NMEL_pad), lambda i: (i, 0)),
        compiler_params=pltpu.CompilerParams(
            dimension_semantics=("parallel",)),
    )(tiles, w_chunks, mel_fb)

    # --- glue: drop padding, match PyTorch layout [B, n_mels, T // hop] ------
    out = out.reshape(B, n_tiles * TM, NMEL_pad)[:, :n_out, :N_MELS]
    return jnp.transpose(out, (0, 2, 1))


if __name__ == "__main__":
    key = jax.random.PRNGKey(0)
    B, T = 2, 2048                                                   # T' = 8 frames
    audio = jax.random.normal(key, (B, T), dtype=jnp.float32)

    out = mel_spectrogram(audio)
    jax.block_until_ready(out)

    assert out.shape == (B, N_MELS, T // HOP_LENGTH), out.shape
    assert out.dtype == jnp.float32
    assert bool(jnp.all(jnp.isfinite(out)))
    print("KERNEL_OK")
</pallas_src>

<mosaic_0001>
module attributes {stable_mosaic.version = 11 : i64} {
  func.func @mel_kernel(%arg0: i32, %arg1: memref<1x11x256xf32, #tpu.memory_space<vmem>>, %arg2: memref<4x256x768xbf16, #tpu.memory_space<vmem>>, %arg3: memref<384x128xbf16, #tpu.memory_space<vmem>>, %arg4: memref<8x128xf32, #tpu.memory_space<vmem>>) attributes {dimension_semantics = [#tpu.dimension_semantics<parallel>], iteration_bounds = array<i64: 2>, scalar_prefetch = 0 : i64, scratch_operands = 0 : i64, tpu.core_type = #tpu.core_type<tc>, window_params = [{transform_indices = @transform_0, window_bounds = array<i64: 1, 11, 256>}, {pipeline_mode = #tpu.pipeline_mode<synchronous>, transform_indices = @transform_1, window_bounds = array<i64: 4, 256, 768>}, {pipeline_mode = #tpu.pipeline_mode<synchronous>, transform_indices = @transform_2, window_bounds = array<i64: 384, 128>}, {transform_indices = @transform_3, window_bounds = array<i64: 8, 128>}]} {
    %c0 = arith.constant 0 : index
    %c0_0 = arith.constant 0 : index
    %c0_1 = arith.constant 0 : index
    %0 = vector.load %arg1[%c0, %c0_0, %c0_1] : memref<1x11x256xf32, #tpu.memory_space<vmem>>, vector<1x11x256xf32>
    %1 = vector.shape_cast %0 : vector<1x11x256xf32> to vector<11x256xf32>
    %cst = arith.constant 0.000000e+00 : f32
    %2 = vector.broadcast %cst : f32 to vector<8x768xf32>
    %3 = vector.extract_strided_slice %1 {offsets = [0, 0], sizes = [8, 256], strides = [1, 1]} : vector<11x256xf32> to vector<8x256xf32>
    %4 = arith.truncf %3 : vector<8x256xf32> to vector<8x256xbf16>
    %c0_2 = arith.constant 0 : index
    %c0_3 = arith.constant 0 : index
    %c0_4 = arith.constant 0 : index
    %5 = vector.load %arg2[%c0_2, %c0_3, %c0_4] : memref<4x256x768xbf16, #tpu.memory_space<vmem>>, vector<1x256x768xbf16>
    %6 = vector.shape_cast %5 : vector<1x256x768xbf16> to vector<256x768xbf16>
    %cst_5 = arith.constant dense<0.000000e+00> : vector<8x768xf32>
    %7 = tpu.matmul %4, %6, %cst_5 {dimension_numbers = #tpu.dot_dimension_numbers<[1], [0], [0], [1], [0, 0, 1, 1], [], []>} : vector<8x256xbf16>, vector<256x768xbf16>, vector<8x768xf32> -> vector<8x768xf32>
    %8 = arith.addf %2, %7 : vector<8x768xf32>
    %9 = vector.extract_strided_slice %1 {offsets = [1, 0], sizes = [8, 256], strides = [1, 1]} : vector<11x256xf32> to vector<8x256xf32>
    %10 = arith.truncf %9 : vector<8x256xf32> to vector<8x256xbf16>
    %c1 = arith.constant 1 : index
    %c0_6 = arith.constant 0 : index
    %c0_7 = arith.constant 0 : index
    %11 = vector.load %arg2[%c1, %c0_6, %c0_7] : memref<4x256x768xbf16, #tpu.memory_space<vmem>>, vector<1x256x768xbf16>
    %12 = vector.shape_cast %11 : vector<1x256x768xbf16> to vector<256x768xbf16>
    %cst_8 = arith.constant dense<0.000000e+00> : vector<8x768xf32>
    %13 = tpu.matmul %10, %12, %cst_8 {dimension_numbers = #tpu.dot_dimension_numbers<[1], [0], [0], [1], [0, 0, 1, 1], [], []>} : vector<8x256xbf16>, vector<256x768xbf16>, vector<8x768xf32> -> vector<8x768xf32>
    %14 = arith.addf %8, %13 : vector<8x768xf32>
    %15 = vector.extract_strided_slice %1 {offsets = [2, 0], sizes = [8, 256], strides = [1, 1]} : vector<11x256xf32> to vector<8x256xf32>
    %16 = arith.truncf %15 : vector<8x256xf32> to vector<8x256xbf16>
    %c2 = arith.constant 2 : index
    %c0_9 = arith.constant 0 : index
    %c0_10 = arith.constant 0 : index
    %17 = vector.load %arg2[%c2, %c0_9, %c0_10] : memref<4x256x768xbf16, #tpu.memory_space<vmem>>, vector<1x256x768xbf16>
    %18 = vector.shape_cast %17 : vector<1x256x768xbf16> to vector<256x768xbf16>
    %cst_11 = arith.constant dense<0.000000e+00> : vector<8x768xf32>
    %19 = tpu.matmul %16, %18, %cst_11 {dimension_numbers = #tpu.dot_dimension_numbers<[1], [0], [0], [1], [0, 0, 1, 1], [], []>} : vector<8x256xbf16>, vector<256x768xbf16>, vector<8x768xf32> -> vector<8x768xf32>
    %20 = arith.addf %14, %19 : vector<8x768xf32>
    %21 = vector.extract_strided_slice %1 {offsets = [3, 0], sizes = [8, 256], strides = [1, 1]} : vector<11x256xf32> to vector<8x256xf32>
    %22 = arith.truncf %21 : vector<8x256xf32> to vector<8x256xbf16>
    %c3 = arith.constant 3 : index
    %c0_12 = arith.constant 0 : index
    %c0_13 = arith.constant 0 : index
    %23 = vector.load %arg2[%c3, %c0_12, %c0_13] : memref<4x256x768xbf16, #tpu.memory_space<vmem>>, vector<1x256x768xbf16>
    %24 = vector.shape_cast %23 : vector<1x256x768xbf16> to vector<256x768xbf16>
    %cst_14 = arith.constant dense<0.000000e+00> : vector<8x768xf32>
    %25 = tpu.matmul %22, %24, %cst_14 {dimension_numbers = #tpu.dot_dimension_numbers<[1], [0], [0], [1], [0, 0, 1, 1], [], []>} : vector<8x256xbf16>, vector<256x768xbf16>, vector<8x768xf32> -> vector<8x768xf32>
    %26 = arith.addf %20, %25 : vector<8x768xf32>
    %27 = vector.extract_strided_slice %26 {offsets = [0, 0], sizes = [8, 384], strides = [1, 1]} : vector<8x768xf32> to vector<8x384xf32>
    %28 = vector.extract_strided_slice %26 {offsets = [0, 384], sizes = [8, 384], strides = [1, 1]} : vector<8x768xf32> to vector<8x384xf32>
    %29 = arith.mulf %27, %27 : vector<8x384xf32>
    %30 = arith.mulf %28, %28 : vector<8x384xf32>
    %31 = arith.addf %29, %30 : vector<8x384xf32>
    %32 = math.sqrt %31 : vector<8x384xf32>
    %33 = arith.truncf %32 : vector<8x384xf32> to vector<8x384xbf16>
    %c0_15 = arith.constant 0 : index
    %c0_16 = arith.constant 0 : index
    %34 = vector.load %arg3[%c0_15, %c0_16] : memref<384x128xbf16, #tpu.memory_space<vmem>>, vector<384x128xbf16>
    %cst_17 = arith.constant dense<0.000000e+00> : vector<8x128xf32>
    %35 = tpu.matmul %33, %34, %cst_17 {dimension_numbers = #tpu.dot_dimension_numbers<[1], [0], [0], [1], [0, 0, 1, 1], [], []>} : vector<8x384xbf16>, vector<384x128xbf16>, vector<8x128xf32> -> vector<8x128xf32>
    %cst_18 = arith.constant 9.99999974E-6 : f32
    %36 = vector.broadcast %cst_18 : f32 to vector<8x128xf32>
    %37 = arith.maximumf %35, %36 : vector<8x128xf32>
    %38 = math.log %37 : vector<8x128xf32>
    %c0_19 = arith.constant 0 : index
    %c0_20 = arith.constant 0 : index
    %39 = vector.load %arg4[%c0_19, %c0_20] : memref<8x128xf32, #tpu.memory_space<vmem>>, vector<8x128xf32>
    tpu.vector_store %arg4[%c0_19, %c0_20], %38 {strides = array<i32>} : memref<8x128xf32, #tpu.memory_space<vmem>>, vector<8x128xf32>,
    return
  }
  func.func @transform_0(%arg0: i32) -> (i32, i32, i32) {
    %c0_i32 = arith.constant 0 : i32
    %c0_i32_0 = arith.constant 0 : i32
    %c0_i32_1 = arith.constant 0 : i32
    return %arg0, %c0_i32, %c0_i32_0 : i32, i32, i32
  }
  func.func @transform_1(%arg0: i32) -> (i32, i32, i32) {
    %c0_i32 = arith.constant 0 : i32
    %c0_i32_0 = arith.constant 0 : i32
    %c0_i32_1 = arith.constant 0 : i32
    %c0_i32_2 = arith.constant 0 : i32
    return %c0_i32, %c0_i32_0, %c0_i32_1 : i32, i32, i32
  }
  func.func @transform_2(%arg0: i32) -> (i32, i32) {
    %c0_i32 = arith.constant 0 : i32
    %c0_i32_0 = arith.constant 0 : i32
    %c0_i32_1 = arith.constant 0 : i32
    return %c0_i32, %c0_i32_0 : i32, i32
  }
  func.func @transform_3(%arg0: i32) -> (i32, i32) {
    %c0_i32 = arith.constant 0 : i32
    %c0_i32_0 = arith.constant 0 : i32
    return %arg0, %c0_i32 : i32, i32
  }
}

</mosaic_0001>

<llo_original>
// kernel: tpu_custom_call.1
$region0: #{tpu_custom_call.1}
  #allocation0 [shape = 'u32[]', space=smem, size = 0x4, offset = 0x4, fixed_abs, tag = 'smem constant byte address 0x4 - core index']
  #allocation1 [shape = 'u32[72,128]{1,0:T(1,128)}', space=vmem, size = 0x9000, scoped, tag = 'internal scratch']
  %s0 = inlined_call_operand.vmem [shape: f32[2,11,256], index: 0, kind: input, shape index: {}]
  %s1 = inlined_call_operand.hbm [shape: bf16[4,256,768], index: 1, kind: input, shape index: {}]
  %s2 = inlined_call_operand.hbm [shape: bf16[384,128], index: 2, kind: input, shape index: {}]
  %s3 = inlined_call_operand.hbm [shape: f32[16,128], index: 3, kind: output, shape index: {}]
  %s4 = sld [smem:[#allocation0]]
  $region53: #{tpu_custom_call.1} parent=0
    _
  %s6 = ssub.s32 1, %s4
  %s7 = scalar_select 0, %s6, %s4
  $region1: #{tpu_custom_call.1} parent=0
    #allocation2 [shape = 'u8[1572864]{0}', space=vmem, size = 0x180000, scoped, tag = 'input window, operand 1, single buffered']
    #allocation3 [shape = 's32[2]{0}', space=sflag, size = 0x8, scoped, tag = 'scoped memory for tpu_custom_call.1']
    #allocation4 [shape = 's32[2]{0}', space=sflag, size = 0x8, scoped, tag = 'scoped memory for tpu_custom_call.1']
    #allocation5 [shape = 'u8[98304]{0}', space=vmem, size = 0x18000, scoped, tag = 'input window, operand 2, single buffered']
    #allocation6 [shape = 's32[1]{0}', space=sflag, size = 0x4, scoped, tag = 'scoped memory for tpu_custom_call.1']
    #allocation7 [shape = 'u8[8192]{0}', space=vmem, size = 0x2000, scoped, tag = 'output window, operand 0']
    %8 = vsyncpa [#allocation3], 0
    %9 = vsyncpa [#allocation6], 0
    %10 = vsyncpa [#allocation4], 0
    %s11 = scalar_lea.sflag [#allocation4], 1
    %12 = vsyncpa %s11, 0
    loop: start=0, step=1, limit=4
    $region2: #{tpu_custom_call.1} parent=1 // loop_pre_header
      _
    $region3: #{tpu_custom_call.1} parent=1 // loop_header
      %s14 = sphi 0, %s18
      %p15 = scmp.ge.s32.totalorder %s14, 4
      %s24 = sphi 0, %s26
      %s27 = sphi 0, %s24
      %s28 = sphi 0, %s27
      %s44 = sphi 0, %s28
      %s48 = sphi 0, %s48
      %s50 = sphi 0, %s48
      %s51 = sphi 0, %s50
      %s65 = sphi 0, %s51
      %s69 = sphi 0, %s69
      %s71 = sphi 0, %s69
      %s72 = sphi 0, %s71
      %s86 = sphi 0, %s72
      %s92 = sphi 0, %s94
      %s95 = sphi 0, %s92
      %s96 = sphi 0, %s95
      %s112 = sphi 0, %s96
    $region4: #{tpu_custom_call.1} parent=1 // loop_header_branch
      %17 = sbr.rel (%p15) target = $region8
    $region5: #{tpu_custom_call.1} parent=1 // loop_body
      %s19 = ssub.s32 %s14, 1
      %s20 = ssub.s32 %s14, 2
      %s21 = sadd.s32 %s14, 1
      %s22 = ssub.s32 %s14, %s21
      %p23 = scmp.eq.s32.totalorder %s22, 0
      %s25 = sadd.s32 %s24, 1
      %s26 = scalar_select %p23, %s24, %s25
      %p29 = pneg %p23
      %p30 = scmp.eq.s32.totalorder %s14, 1
      %p31 = por %p29, %p30
      %p32 = scmp.ne.s32.totalorder %s24, %s27
      %p33 = scmp.eq.s32.totalorder %s14, 0
      %p34 = por %p32, %p33
      %p35 = scmp.ne.s32.totalorder %s24, %s27
      %p36 = scmp.eq.s32.totalorder %s19, 1
      %p37 = por %p35, %p36
      %p38 = scmp.ne.s32.totalorder %s27, %s28
      %p39 = scmp.eq.s32.totalorder %s19, 0
      %p40 = por %p38, %p39
      %p41 = scmp.ne.s32.totalorder %s27, %s28
      %p42 = scmp.eq.s32.totalorder %s20, 1
      %p43 = por %p41, %p42
      %p45 = scmp.ne.s32.totalorder %s28, %s44
      %p46 = scmp.eq.s32.totalorder %s20, 0
      %p47 = por %p45, %p46
      %s49 = sadd.s32 %s48, 1
      %p52 = scmp.eq.s32.totalorder %s14, 1
      %p53 = scmp.ne.s32.totalorder %s48, %s50
      %p54 = scmp.eq.s32.totalorder %s14, 0
      %p55 = por %p53, %p54
      %p56 = scmp.ne.s32.totalorder %s48, %s50
      %p57 = scmp.eq.s32.totalorder %s19, 1
      %p58 = por %p56, %p57
      %p59 = scmp.ne.s32.totalorder %s50, %s51
      %p60 = scmp.eq.s32.totalorder %s19, 0
      %p61 = por %p59, %p60
      %p62 = scmp.ne.s32.totalorder %s50, %s51
      %p63 = scmp.eq.s32.totalorder %s20, 1
      %p64 = por %p62, %p63
      %p66 = scmp.ne.s32.totalorder %s51, %s65
      %p67 = scmp.eq.s32.totalorder %s20, 0
      %p68 = por %p66, %p67
      %s70 = sadd.s32 %s69, 1
      %p73 = scmp.eq.s32.totalorder %s14, 1
      %p74 = scmp.ne.s32.totalorder %s69, %s71
      %p75 = scmp.eq.s32.totalorder %s14, 0
      %p76 = por %p74, %p75
      %p77 = scmp.ne.s32.totalorder %s69, %s71
      %p78 = scmp.eq.s32.totalorder %s19, 1
      %p79 = por %p77, %p78
      %p80 = scmp.ne.s32.totalorder %s71, %s72
      %p81 = scmp.eq.s32.totalorder %s19, 0
      %p82 = por %p80, %p81
      %p83 = scmp.ne.s32.totalorder %s71, %s72
      %p84 = scmp.eq.s32.totalorder %s20, 1
      %p85 = por %p83, %p84
      %p87 = scmp.ne.s32.totalorder %s72, %s86
      %p88 = scmp.eq.s32.totalorder %s20, 0
      %p89 = por %p87, %p88
      %s90 = ssub.s32 %s14, %s21
      %p91 = scmp.eq.s32.totalorder %s90, 0
      %s93 = sadd.s32 %s92, 1
      %s94 = scalar_select %p91, %s92, %s93
      %p97 = pneg %p91
      %p98 = scmp.eq.s32.totalorder %s14, 1
      %p99 = por %p97, %p98
      %p100 = scmp.ne.s32.totalorder %s92, %s95
      %p101 = scmp.eq.s32.totalorder %s14, 0
      %p102 = por %p100, %p101
      %p103 = scmp.ne.s32.totalorder %s92, %s95
      %p104 = scmp.eq.s32.totalorder %s19, 1
      %p105 = por %p103, %p104
      %p106 = scmp.ne.s32.totalorder %s95, %s96
      %p107 = scmp.eq.s32.totalorder %s19, 0
      %p108 = por %p106, %p107
      %p109 = scmp.ne.s32.totalorder %s95, %s96
      %p110 = scmp.eq.s32.totalorder %s20, 1
      %p111 = por %p109, %p110
      %p113 = scmp.ne.s32.totalorder %s96, %s112
      %p114 = scmp.eq.s32.totalorder %s20, 0
      %p115 = por %p113, %p114
      %p116 = scmp.le.s32.totalorder 1, %s14
      %p117 = scmp.lt.s32.totalorder %s14, 3
      %p118 = pnand %p116, %p117
      %p119 = pneg %p118
      // Predicated region
      $region9: #{tpu_custom_call.1} parent=5 // pred_check
        _
      $region10: #{tpu_custom_call.1} parent=5 // pred_check_branch
        %121 = sbr.rel (%p118) target = $region12
      $region11: #{tpu_custom_call.1} parent=5 // pred_region
        %s122 = ssub.s32 %s14, 1
        // Predicated region
        $region13: #{tpu_custom_call.1} parent=11 // pred_check
          %p123 = pneg %p61
        $region14: #{tpu_custom_call.1} parent=11 // pred_check_branch
          %125 = sbr.rel (%p123) target = $region16
        $region15: #{tpu_custom_call.1} parent=11 // pred_region
          %127 = vsyncadd [#allocation3], 0
          %s128 = sshll.u32 %s1, 4
          %s129 = int_to_ptr.hbm [resolvable:$true] %s128
          %s130 = sshll.u32 [#allocation2], 4
          %s131 = int_to_ptr.vmem [resolvable:$true] %s130
          %136 = dma.hbm_to_vmem [thread:$0]  %s129, 49152, %s131, [#allocation3], 384, 384, 24
        $region16: #{tpu_custom_call.1} parent=11 // pred_fallthru
          _
        // Predicated region
        $region17: #{tpu_custom_call.1} parent=11 // pred_check
          %p137 = pneg %p82
        $region18: #{tpu_custom_call.1} parent=11 // pred_check_branch
          %139 = sbr.rel (%p137) target = $region20
        $region19: #{tpu_custom_call.1} parent=11 // pred_region
          %141 = vsyncadd [#allocation6], 0
          %s142 = sshll.u32 %s2, 4
          %s143 = int_to_ptr.hbm [resolvable:$true] %s142
          %s144 = sshll.u32 [#allocation5], 4
          %s145 = int_to_ptr.vmem [resolvable:$true] %s144
          %150 = dma.hbm_to_vmem [thread:$0]  %s143, 3072, %s145, [#allocation6], 64, 64, 4
        $region20: #{tpu_custom_call.1} parent=11 // pred_fallthru
          _
      $region12: #{tpu_custom_call.1} parent=5 // pred_fallthru
        _
      %p151 = scmp.lt.s32.totalorder %s14, 2
      // Predicated region
      $region21: #{tpu_custom_call.1} parent=5 // pred_check
        %p152 = pneg %p151
      $region22: #{tpu_custom_call.1} parent=5 // pred_check_branch
        %154 = sbr.rel (%p152) target = $region24
      $region23: #{tpu_custom_call.1} parent=5 // pred_region
        // Predicated region
        $region25: #{tpu_custom_call.1} parent=23 // pred_check
          %p155 = pneg %p34
        $region26: #{tpu_custom_call.1} parent=23 // pred_check_branch
          %157 = sbr.rel (%p155) target = $region28
        $region27: #{tpu_custom_call.1} parent=23 // pred_region
          %p158 = scmp.lt.s32.totalorder %s14, 1
          %s159 = scalar_select %p158, %s14, 1
          %s160 = smul.addr %s159, 4
          %s161 = smul.addr %s160, 8
          %s162 = scalar_lea.vmem %s0, %s161
        $region28: #{tpu_custom_call.1} parent=23 // pred_fallthru
          _
      $region24: #{tpu_custom_call.1} parent=5 // pred_fallthru
        _
      %p163 = scmp.le.s32.totalorder 1, %s14
      %p164 = scmp.lt.s32.totalorder %s14, 3
      %p165 = pnand %p163, %p164
      %p166 = pneg %p165
      // Predicated region
      $region29: #{tpu_custom_call.1} parent=5 // pred_check
        _
      $region30: #{tpu_custom_call.1} parent=5 // pred_check_branch
        %168 = sbr.rel (%p165) target = $region32
      $region31: #{tpu_custom_call.1} parent=5 // pred_region
        %s169 = ssub.s32 %s14, 1
        // Predicated region
        $region33: #{tpu_custom_call.1} parent=31 // pred_check
          %p170 = pneg %p61
        $region34: #{tpu_custom_call.1} parent=31 // pred_check_branch
          %172 = sbr.rel (%p170) target = $region36
        $region35: #{tpu_custom_call.1} parent=31 // pred_region
          %174 = dma.done [#allocation3], 49152
        $region36: #{tpu_custom_call.1} parent=31 // pred_fallthru
          _
        // Predicated region
        $region37: #{tpu_custom_call.1} parent=31 // pred_check
          %p175 = pneg %p82
        $region38: #{tpu_custom_call.1} parent=31 // pred_check_branch
          %177 = sbr.rel (%p175) target = $region40
        $region39: #{tpu_custom_call.1} parent=31 // pred_region
          %179 = dma.done [#allocation6], 3072
        $region40: #{tpu_custom_call.1} parent=31 // pred_fallthru
          _
        %p180 = scmp.lt.s32.totalorder %s19, 1
        %s181 = scalar_select %p180, %s19, 1
        %s182 = smul.addr %s181, 4
        %s183 = smul.addr %s182, 8
        %s184 = scalar_lea.vmem %s0, %s183
        %p185 = pneg %p40
        %p186 = pneg %p37
        %p187 = pneg %p61
        %p188 = pneg %p58
        %p189 = pneg %p82
        %p190 = pneg %p79
        %p191 = pneg %p108
        %p192 = pneg %p105
        %s193 = sand.u32 %s95, 1
        %s194 = scalar_lea.sflag [#allocation4], %s193
        %s195 = sand.u32 %s95, 1
        %s196 = smul.addr %s195, 8
        %s197 = scalar_lea.vmem [#allocation7], %s196
        %p198 = scmp.lt.s32.totalorder %s19, 1
        %s199 = scalar_select %p198, %s19, 1
        %s200 = smul.addr %s199, 4
        %s201 = smul.addr %s200, 8
        %s202 = scalar_lea.vmem %s0, %s201
        %v203 = vld [vmem:[%s202] sm:$0xff]
        %v204 = vld [vmem:[%s202 + $0x8] sm:$0xff]
        %v205 = vld [vmem:[%s202 + $0x10] sm:$0x7]
        %v206 = vld [vmem:[%s202 + $0x18] sm:$0x7]
        %v207 = vpack.c.bf16 %v203, %v203
        %v208 = vpack.c.bf16 %v204, %v204
        %v209 = vld [vmem:[#allocation2] sm:$0xff]
        %v210 = vld [vmem:[#allocation2 + $0x8] sm:$0xff]
        %v211 = vld [vmem:[#allocation2 + $0x10] sm:$0xff]
        %v212 = vld [vmem:[#allocation2 + $0x18] sm:$0xff]
        %v213 = vld [vmem:[#allocation2 + $0x20] sm:$0xff]
        %v214 = vld [vmem:[#allocation2 + $0x28] sm:$0xff]
        %v215 = vld [vmem:[#allocation2 + $0x30] sm:$0xff]
        %v216 = vld [vmem:[#allocation2 + $0x38] sm:$0xff]
        %v217 = vld [vmem:[#allocation2 + $0x40] sm:$0xff]
        %v218 = vld [vmem:[#allocation2 + $0x48] sm:$0xff]
        %v219 = vld [vmem:[#allocation2 + $0x50] sm:$0xff]
        %v220 = vld [vmem:[#allocation2 + $0x58] sm:$0xff]
        %v221 = vld [vmem:[#allocation2 + $0x60] sm:$0xff]
        %v222 = vld [vmem:[#allocation2 + $0x68] sm:$0xff]
        %v223 = vld [vmem:[#allocation2 + $0x70] sm:$0xff]
        %v224 = vld [vmem:[#allocation2 + $0x78] sm:$0xff]
        %v225 = vld [vmem:[#allocation2 + $0x80] sm:$0xff]
        %v226 = vld [vmem:[#allocation2 + $0x88] sm:$0xff]
        %v227 = vld [vmem:[#allocation2 + $0x90] sm:$0xff]
        %v228 = vld [vmem:[#allocation2 + $0x98] sm:$0xff]
        %v229 = vld [vmem:[#allocation2 + $0xa0] sm:$0xff]
        %v230 = vld [vmem:[#allocation2 + $0xa8] sm:$0xff]
        %v231 = vld [vmem:[#allocation2 + $0xb0] sm:$0xff]
        %v232 = vld [vmem:[#allocation2 + $0xb8] sm:$0xff]
        %v233 = vld [vmem:[#allocation2 + $0xc0] sm:$0xff]
        %v234 = vld [vmem:[#allocation2 + $0xc8] sm:$0xff]
        %v235 = vld [vmem:[#allocation2 + $0xd0] sm:$0xff]
        %v236 = vld [vmem:[#allocation2 + $0xd8] sm:$0xff]
        %v237 = vld [vmem:[#allocation2 + $0xe0] sm:$0xff]
        %v238 = vld [vmem:[#allocation2 + $0xe8] sm:$0xff]
        %v239 = vld [vmem:[#allocation2 + $0xf0] sm:$0xff]
        %v240 = vld [vmem:[#allocation2 + $0xf8] sm:$0xff]
        %v241 = vld [vmem:[#allocation2 + $0x100] sm:$0xff]
        %v242 = vld [vmem:[#allocation2 + $0x108] sm:$0xff]
        %v243 = vld [vmem:[#allocation2 + $0x110] sm:$0xff]
        %v244 = vld [vmem:[#allocation2 + $0x118] sm:$0xff]
        %v245 = vld [vmem:[#allocation2 + $0x120] sm:$0xff]
        %v246 = vld [vmem:[#allocation2 + $0x128] sm:$0xff]
        %v247 = vld [vmem:[#allocation2 + $0x130] sm:$0xff]
        %v248 = vld [vmem:[#allocation2 + $0x138] sm:$0xff]
        %v249 = vld [vmem:[#allocation2 + $0x140] sm:$0xff]
        %v250 = vld [vmem:[#allocation2 + $0x148] sm:$0xff]
        %v251 = vld [vmem:[#allocation2 + $0x150] sm:$0xff]
        %v252 = vld [vmem:[#allocation2 + $0x158] sm:$0xff]
        %v253 = vld [vmem:[#allocation2 + $0x160] sm:$0xff]
        %v254 = vld [vmem:[#allocation2 + $0x168] sm:$0xff]
        %v255 = vld [vmem:[#allocation2 + $0x170] sm:$0xff]
        %v256 = vld [vmem:[#allocation2 + $0x178] sm:$0xff]
        %v257 = vld [vmem:[#allocation2 + $0x180] sm:$0xff]
        %v258 = vld [vmem:[#allocation2 + $0x188] sm:$0xff]
        %v259 = vld [vmem:[#allocation2 + $0x190] sm:$0xff]
        %v260 = vld [vmem:[#allocation2 + $0x198] sm:$0xff]
        %v261 = vld [vmem:[#allocation2 + $0x1a0] sm:$0xff]
        %v262 = vld [vmem:[#allocation2 + $0x1a8] sm:$0xff]
        %v263 = vld [vmem:[#allocation2 + $0x1b0] sm:$0xff]
        %v264 = vld [vmem:[#allocation2 + $0x1b8] sm:$0xff]
        %v265 = vld [vmem:[#allocation2 + $0x1c0] sm:$0xff]
        %v266 = vld [vmem:[#allocation2 + $0x1c8] sm:$0xff]
        %v267 = vld [vmem:[#allocation2 + $0x1d0] sm:$0xff]
        %v268 = vld [vmem:[#allocation2 + $0x1d8] sm:$0xff]
        %v269 = vld [vmem:[#allocation2 + $0x1e0] sm:$0xff]
        %v270 = vld [vmem:[#allocation2 + $0x1e8] sm:$0xff]
        %v271 = vld [vmem:[#allocation2 + $0x1f0] sm:$0xff]
        %v272 = vld [vmem:[#allocation2 + $0x1f8] sm:$0xff]
        %v273 = vld [vmem:[#allocation2 + $0x200] sm:$0xff]
        %v274 = vld [vmem:[#allocation2 + $0x208] sm:$0xff]
        %v275 = vld [vmem:[#allocation2 + $0x210] sm:$0xff]
        %v276 = vld [vmem:[#allocation2 + $0x218] sm:$0xff]
        %v277 = vld [vmem:[#allocation2 + $0x220] sm:$0xff]
        %v278 = vld [vmem:[#allocation2 + $0x228] sm:$0xff]
        %v279 = vld [vmem:[#allocation2 + $0x230] sm:$0xff]
        %v280 = vld [vmem:[#allocation2 + $0x238] sm:$0xff]
        %v281 = vld [vmem:[#allocation2 + $0x240] sm:$0xff]
        %v282 = vld [vmem:[#allocation2 + $0x248] sm:$0xff]
        %v283 = vld [vmem:[#allocation2 + $0x250] sm:$0xff]
        %v284 = vld [vmem:[#allocation2 + $0x258] sm:$0xff]
        %v285 = vld [vmem:[#allocation2 + $0x260] sm:$0xff]
        %v286 = vld [vmem:[#allocation2 + $0x268] sm:$0xff]
        %v287 = vld [vmem:[#allocation2 + $0x270] sm:$0xff]
        %v288 = vld [vmem:[#allocation2 + $0x278] sm:$0xff]
        %v289 = vld [vmem:[#allocation2 + $0x280] sm:$0xff]
        %v290 = vld [vmem:[#allocation2 + $0x288] sm:$0xff]
        %v291 = vld [vmem:[#allocation2 + $0x290] sm:$0xff]
        %v292 = vld [vmem:[#allocation2 + $0x298] sm:$0xff]
        %v293 = vld [vmem:[#allocation2 + $0x2a0] sm:$0xff]
        %v294 = vld [vmem:[#allocation2 + $0x2a8] sm:$0xff]
        %v295 = vld [vmem:[#allocation2 + $0x2b0] sm:$0xff]
        %v296 = vld [vmem:[#allocation2 + $0x2b8] sm:$0xff]
        %v297 = vld [vmem:[#allocation2 + $0x2c0] sm:$0xff]
        %v298 = vld [vmem:[#allocation2 + $0x2c8] sm:$0xff]
        %v299 = vld [vmem:[#allocation2 + $0x2d0] sm:$0xff]
        %v300 = vld [vmem:[#allocation2 + $0x2d8] sm:$0xff]
        %v301 = vld [vmem:[#allocation2 + $0x2e0] sm:$0xff]
        %v302 = vld [vmem:[#allocation2 + $0x2e8] sm:$0xff]
        %v303 = vld [vmem:[#allocation2 + $0x2f0] sm:$0xff]
        %v304 = vld [vmem:[#allocation2 + $0x2f8] sm:$0xff]
        %v305 = vpack.c.bf16 %v205, %v203
        %v306 = vpack.c.bf16 %v206, %v204
        %s307 = scalar_lea.vmem [#allocation2], 768
        %v308 = vld [vmem:[%s307] sm:$0xff]
        %v309 = vld [vmem:[%s307 + $0x8] sm:$0xff]
        %v310 = vld [vmem:[%s307 + $0x10] sm:$0xff]
        %v311 = vld [vmem:[%s307 + $0x18] sm:$0xff]
        %v312 = vld [vmem:[%s307 + $0x20] sm:$0xff]
        %v313 = vld [vmem:[%s307 + $0x28] sm:$0xff]
        %v314 = vld [vmem:[%s307 + $0x30] sm:$0xff]
        %v315 = vld [vmem:[%s307 + $0x38] sm:$0xff]
        %v316 = vld [vmem:[%s307 + $0x40] sm:$0xff]
        %v317 = vld [vmem:[%s307 + $0x48] sm:$0xff]
        %v318 = vld [vmem:[%s307 + $0x50] sm:$0xff]
        %v319 = vld [vmem:[%s307 + $0x58] sm:$0xff]
        %v320 = vld [vmem:[%s307 + $0x60] sm:$0xff]
        %v321 = vld [vmem:[%s307 + $0x68] sm:$0xff]
        %v322 = vld [vmem:[%s307 + $0x70] sm:$0xff]
        %v323 = vld [vmem:[%s307 + $0x78] sm:$0xff]
        %v324 = vld [vmem:[%s307 + $0x80] sm:$0xff]
        %v325 = vld [vmem:[%s307 + $0x88] sm:$0xff]
        %v326 = vld [vmem:[%s307 + $0x90] sm:$0xff]
        %v327 = vld [vmem:[%s307 + $0x98] sm:$0xff]
        %v328 = vld [vmem:[%s307 + $0xa0] sm:$0xff]
        %v329 = vld [vmem:[%s307 + $0xa8] sm:$0xff]
        %v330 = vld [vmem:[%s307 + $0xb0] sm:$0xff]
        %v331 = vld [vmem:[%s307 + $0xb8] sm:$0xff]
        %v332 = vld [vmem:[%s307 + $0xc0] sm:$0xff]
        %v333 = vld [vmem:[%s307 + $0xc8] sm:$0xff]
        %v334 = vld [vmem:[%s307 + $0xd0] sm:$0xff]
        %v335 = vld [vmem:[%s307 + $0xd8] sm:$0xff]
        %v336 = vld [vmem:[%s307 + $0xe0] sm:$0xff]
        %v337 = vld [vmem:[%s307 + $0xe8] sm:$0xff]
        %v338 = vld [vmem:[%s307 + $0xf0] sm:$0xff]
        %v339 = vld [vmem:[%s307 + $0xf8] sm:$0xff]
        %v340 = vld [vmem:[%s307 + $0x100] sm:$0xff]
        %v341 = vld [vmem:[%s307 + $0x108] sm:$0xff]
        %v342 = vld [vmem:[%s307 + $0x110] sm:$0xff]
        %v343 = vld [vmem:[%s307 + $0x118] sm:$0xff]
        %v344 = vld [vmem:[%s307 + $0x120] sm:$0xff]
        %v345 = vld [vmem:[%s307 + $0x128] sm:$0xff]
        %v346 = vld [vmem:[%s307 + $0x130] sm:$0xff]
        %v347 = vld [vmem:[%s307 + $0x138] sm:$0xff]
        %v348 = vld [vmem:[%s307 + $0x140] sm:$0xff]
        %v349 = vld [vmem:[%s307 + $0x148] sm:$0xff]
        %v350 = vld [vmem:[%s307 + $0x150] sm:$0xff]
        %v351 = vld [vmem:[%s307 + $0x158] sm:$0xff]
        %v352 = vld [vmem:[%s307 + $0x160] sm:$0xff]
        %v353 = vld [vmem:[%s307 + $0x168] sm:$0xff]
        %v354 = vld [vmem:[%s307 + $0x170] sm:$0xff]
        %v355 = vld [vmem:[%s307 + $0x178] sm:$0xff]
        %v356 = vld [vmem:[%s307 + $0x180] sm:$0xff]
        %v357 = vld [vmem:[%s307 + $0x188] sm:$0xff]
        %v358 = vld [vmem:[%s307 + $0x190] sm:$0xff]
        %v359 = vld [vmem:[%s307 + $0x198] sm:$0xff]
        %v360 = vld [vmem:[%s307 + $0x1a0] sm:$0xff]
        %v361 = vld [vmem:[%s307 + $0x1a8] sm:$0xff]
        %v362 = vld [vmem:[%s307 + $0x1b0] sm:$0xff]
        %v363 = vld [vmem:[%s307 + $0x1b8] sm:$0xff]
        %v364 = vld [vmem:[%s307 + $0x1c0] sm:$0xff]
        %v365 = vld [vmem:[%s307 + $0x1c8] sm:$0xff]
        %v366 = vld [vmem:[%s307 + $0x1d0] sm:$0xff]
        %v367 = vld [vmem:[%s307 + $0x1d8] sm:$0xff]
        %v368 = vld [vmem:[%s307 + $0x1e0] sm:$0xff]
        %v369 = vld [vmem:[%s307 + $0x1e8] sm:$0xff]
        %v370 = vld [vmem:[%s307 + $0x1f0] sm:$0xff]
        %v371 = vld [vmem:[%s307 + $0x1f8] sm:$0xff]
        %v372 = vld [vmem:[%s307 + $0x200] sm:$0xff]
        %v373 = vld [vmem:[%s307 + $0x208] sm:$0xff]
        %v374 = vld [vmem:[%s307 + $0x210] sm:$0xff]
        %v375 = vld [vmem:[%s307 + $0x218] sm:$0xff]
        %v376 = vld [vmem:[%s307 + $0x220] sm:$0xff]
        %v377 = vld [vmem:[%s307 + $0x228] sm:$0xff]
        %v378 = vld [vmem:[%s307 + $0x230] sm:$0xff]
        %v379 = vld [vmem:[%s307 + $0x238] sm:$0xff]
        %v380 = vld [vmem:[%s307 + $0x240] sm:$0xff]
        %v381 = vld [vmem:[%s307 + $0x248] sm:$0xff]
        %v382 = vld [vmem:[%s307 + $0x250] sm:$0xff]
        %v383 = vld [vmem:[%s307 + $0x258] sm:$0xff]
        %v384 = vld [vmem:[%s307 + $0x260] sm:$0xff]
        %v385 = vld [vmem:[%s307 + $0x268] sm:$0xff]
        %v386 = vld [vmem:[%s307 + $0x270] sm:$0xff]
        %v387 = vld [vmem:[%s307 + $0x278] sm:$0xff]
        %v388 = vld [vmem:[%s307 + $0x280] sm:$0xff]
        %v389 = vld [vmem:[%s307 + $0x288] sm:$0xff]
        %v390 = vld [vmem:[%s307 + $0x290] sm:$0xff]
        %v391 = vld [vmem:[%s307 + $0x298] sm:$0xff]
        %v392 = vld [vmem:[%s307 + $0x2a0] sm:$0xff]
        %v393 = vld [vmem:[%s307 + $0x2a8] sm:$0xff]
        %v394 = vld [vmem:[%s307 + $0x2b0] sm:$0xff]
        %v395 = vld [vmem:[%s307 + $0x2b8] sm:$0xff]
        %v396 = vld [vmem:[%s307 + $0x2c0] sm:$0xff]
        %v397 = vld [vmem:[%s307 + $0x2c8] sm:$0xff]
        %v398 = vld [vmem:[%s307 + $0x2d0] sm:$0xff]
        %v399 = vld [vmem:[%s307 + $0x2d8] sm:$0xff]
        %v400 = vld [vmem:[%s307 + $0x2e0] sm:$0xff]
        %v401 = vld [vmem:[%s307 + $0x2e8] sm:$0xff]
        %v402 = vld [vmem:[%s307 + $0x2f0] sm:$0xff]
        %v403 = vld [vmem:[%s307 + $0x2f8] sm:$0xff]
        %v405 = vshrl.u32 %v305, 16
        %v407 = vshll.u32 %v305, 16
        %v409 = vrot.slane %v407, 1
        %v410 = vor.u32 %v405, %v409
        %v412 = vshrl.u32 %v306, 16
        %v414 = vshll.u32 %v306, 16
        %v416 = vrot.slane %v414, 1
        %v417 = vor.u32 %v412, %v416
        %v516 = vunpack.c.l.b16 %v308
        %v517 = vunpack.c.h.b16 %v308
        %v518 = vunpack.c.l.b16 %v309
        %v519 = vunpack.c.h.b16 %v309
        %v520 = vunpack.c.l.b16 %v310
        %v521 = vunpack.c.h.b16 %v310
        %v522 = vunpack.c.l.b16 %v311
        %v523 = vunpack.c.h.b16 %v311
        %v524 = vunpack.c.l.b16 %v312
        %v525 = vunpack.c.h.b16 %v312
        %v526 = vunpack.c.l.b16 %v313
        %v527 = vunpack.c.h.b16 %v313
        %v528 = vunpack.c.l.b16 %v314
        %v529 = vunpack.c.h.b16 %v314
        %v530 = vunpack.c.l.b16 %v315
        %v531 = vunpack.c.h.b16 %v315
        %v532 = vunpack.c.l.b16 %v316
        %v533 = vunpack.c.h.b16 %v316
        %v534 = vunpack.c.l.b16 %v317
        %v535 = vunpack.c.h.b16 %v317
        %v536 = vunpack.c.l.b16 %v318
        %v537 = vunpack.c.h.b16 %v318
        %v538 = vunpack.c.l.b16 %v319
        %v539 = vunpack.c.h.b16 %v319
        %v540 = vunpack.c.l.b16 %v320
        %v541 = vunpack.c.h.b16 %v320
        %v542 = vunpack.c.l.b16 %v321
        %v543 = vunpack.c.h.b16 %v321
        %v544 = vunpack.c.l.b16 %v322
        %v545 = vunpack.c.h.b16 %v322
        %v546 = vunpack.c.l.b16 %v323
        %v547 = vunpack.c.h.b16 %v323
        %v548 = vunpack.c.l.b16 %v324
        %v549 = vunpack.c.h.b16 %v324
        %v550 = vunpack.c.l.b16 %v325
        %v551 = vunpack.c.h.b16 %v325
        %v552 = vunpack.c.l.b16 %v326
        %v553 = vunpack.c.h.b16 %v326
        %v554 = vunpack.c.l.b16 %v327
        %v555 = vunpack.c.h.b16 %v327
        %v556 = vunpack.c.l.b16 %v328
        %v557 = vunpack.c.h.b16 %v328
        %v558 = vunpack.c.l.b16 %v329
        %v559 = vunpack.c.h.b16 %v329
        %v560 = vunpack.c.l.b16 %v330
        %v561 = vunpack.c.h.b16 %v330
        %v562 = vunpack.c.l.b16 %v331
        %v563 = vunpack.c.h.b16 %v331
        %v564 = vunpack.c.l.b16 %v332
        %v565 = vunpack.c.h.b16 %v332
        %v566 = vunpack.c.l.b16 %v333
        %v567 = vunpack.c.h.b16 %v333
        %v568 = vunpack.c.l.b16 %v334
        %v569 = vunpack.c.h.b16 %v334
        %v570 = vunpack.c.l.b16 %v335
        %v571 = vunpack.c.h.b16 %v335
        %v572 = vunpack.c.l.b16 %v336
        %v573 = vunpack.c.h.b16 %v336
        %v574 = vunpack.c.l.b16 %v337
        %v575 = vunpack.c.h.b16 %v337
        %v576 = vunpack.c.l.b16 %v338
        %v577 = vunpack.c.h.b16 %v338
        %v578 = vunpack.c.l.b16 %v339
        %v579 = vunpack.c.h.b16 %v339
        %v580 = vunpack.c.l.b16 %v340
        %v581 = vunpack.c.h.b16 %v340
        %v582 = vunpack.c.l.b16 %v341
        %v583 = vunpack.c.h.b16 %v341
        %v584 = vunpack.c.l.b16 %v342
        %v585 = vunpack.c.h.b16 %v342
        %v586 = vunpack.c.l.b16 %v343
        %v587 = vunpack.c.h.b16 %v343
        %v588 = vunpack.c.l.b16 %v344
        %v589 = vunpack.c.h.b16 %v344
        %v590 = vunpack.c.l.b16 %v345
        %v591 = vunpack.c.h.b16 %v345
        %v592 = vunpack.c.l.b16 %v346
        %v593 = vunpack.c.h.b16 %v346
        %v594 = vunpack.c.l.b16 %v347
        %v595 = vunpack.c.h.b16 %v347
        %v596 = vunpack.c.l.b16 %v348
        %v597 = vunpack.c.h.b16 %v348
        %v598 = vunpack.c.l.b16 %v349
        %v599 = vunpack.c.h.b16 %v349
        %v600 = vunpack.c.l.b16 %v350
        %v601 = vunpack.c.h.b16 %v350
        %v602 = vunpack.c.l.b16 %v351
        %v603 = vunpack.c.h.b16 %v351
        %v604 = vunpack.c.l.b16 %v352
        %v605 = vunpack.c.h.b16 %v352
        %v606 = vunpack.c.l.b16 %v353
        %v607 = vunpack.c.h.b16 %v353
        %v608 = vunpack.c.l.b16 %v354
        %v609 = vunpack.c.h.b16 %v354
        %v610 = vunpack.c.l.b16 %v355
        %v611 = vunpack.c.h.b16 %v355
        %v612 = vunpack.c.l.b16 %v356
        %v613 = vunpack.c.h.b16 %v356
        %v614 = vunpack.c.l.b16 %v357
        %v615 = vunpack.c.h.b16 %v357
        %v616 = vunpack.c.l.b16 %v358
        %v617 = vunpack.c.h.b16 %v358
        %v618 = vunpack.c.l.b16 %v359
        %v619 = vunpack.c.h.b16 %v359
        %v620 = vunpack.c.l.b16 %v360
        %v621 = vunpack.c.h.b16 %v360
        %v622 = vunpack.c.l.b16 %v361
        %v623 = vunpack.c.h.b16 %v361
        %v624 = vunpack.c.l.b16 %v362
        %v625 = vunpack.c.h.b16 %v362
        %v626 = vunpack.c.l.b16 %v363
        %v627 = vunpack.c.h.b16 %v363
        %v628 = vunpack.c.l.b16 %v364
        %v629 = vunpack.c.h.b16 %v364
        %v630 = vunpack.c.l.b16 %v365
        %v631 = vunpack.c.h.b16 %v365
        %v632 = vunpack.c.l.b16 %v366
        %v633 = vunpack.c.h.b16 %v366
        %v634 = vunpack.c.l.b16 %v367
        %v635 = vunpack.c.h.b16 %v367
        %v636 = vunpack.c.l.b16 %v368
        %v637 = vunpack.c.h.b16 %v368
        %v638 = vunpack.c.l.b16 %v369
        %v639 = vunpack.c.h.b16 %v369
        %v640 = vunpack.c.l.b16 %v370
        %v641 = vunpack.c.h.b16 %v370
        %v642 = vunpack.c.l.b16 %v371
        %v643 = vunpack.c.h.b16 %v371
        %v644 = vunpack.c.l.b16 %v372
        %v645 = vunpack.c.h.b16 %v372
        %v646 = vunpack.c.l.b16 %v373
        %v647 = vunpack.c.h.b16 %v373
        %v648 = vunpack.c.l.b16 %v374
        %v649 = vunpack.c.h.b16 %v374
        %v650 = vunpack.c.l.b16 %v375
        %v651 = vunpack.c.h.b16 %v375
        %v652 = vunpack.c.l.b16 %v376
        %v653 = vunpack.c.h.b16 %v376
        %v654 = vunpack.c.l.b16 %v377
        %v655 = vunpack.c.h.b16 %v377
        %v656 = vunpack.c.l.b16 %v378
        %v657 = vunpack.c.h.b16 %v378
        %v658 = vunpack.c.l.b16 %v379
        %v659 = vunpack.c.h.b16 %v379
        %v660 = vunpack.c.l.b16 %v380
        %v661 = vunpack.c.h.b16 %v380
        %v662 = vunpack.c.l.b16 %v381
        %v663 = vunpack.c.h.b16 %v381
        %v664 = vunpack.c.l.b16 %v382
        %v665 = vunpack.c.h.b16 %v382
        %v666 = vunpack.c.l.b16 %v383
        %v667 = vunpack.c.h.b16 %v383
        %v668 = vunpack.c.l.b16 %v384
        %v669 = vunpack.c.h.b16 %v384
        %v670 = vunpack.c.l.b16 %v385
        %v671 = vunpack.c.h.b16 %v385
        %v672 = vunpack.c.l.b16 %v386
        %v673 = vunpack.c.h.b16 %v386
        %v674 = vunpack.c.l.b16 %v387
        %v675 = vunpack.c.h.b16 %v387
        %v676 = vunpack.c.l.b16 %v388
        %v677 = vunpack.c.h.b16 %v388
        %v678 = vunpack.c.l.b16 %v389
        %v679 = vunpack.c.h.b16 %v389
        %v680 = vunpack.c.l.b16 %v390
        %v681 = vunpack.c.h.b16 %v390
        %v682 = vunpack.c.l.b16 %v391
        %v683 = vunpack.c.h.b16 %v391
        %v684 = vunpack.c.l.b16 %v392
        %v685 = vunpack.c.h.b16 %v392
        %v686 = vunpack.c.l.b16 %v393
        %v687 = vunpack.c.h.b16 %v393
        %v688 = vunpack.c.l.b16 %v394
        %v689 = vunpack.c.h.b16 %v394
        %v690 = vunpack.c.l.b16 %v395
        %v691 = vunpack.c.h.b16 %v395
        %v692 = vunpack.c.l.b16 %v396
        %v693 = vunpack.c.h.b16 %v396
        %v694 = vunpack.c.l.b16 %v397
        %v695 = vunpack.c.h.b16 %v397
        %v696 = vunpack.c.l.b16 %v398
        %v697 = vunpack.c.h.b16 %v398
        %v698 = vunpack.c.l.b16 %v399
        %v699 = vunpack.c.h.b16 %v399
        %v700 = vunpack.c.l.b16 %v400
        %v701 = vunpack.c.h.b16 %v400
        %v702 = vunpack.c.l.b16 %v401
        %v703 = vunpack.c.h.b16 %v401
        %v704 = vunpack.c.l.b16 %v402
        %v705 = vunpack.c.h.b16 %v402
        %v706 = vunpack.c.l.b16 %v403
        %v707 = vunpack.c.h.b16 %v403
        %v708 = vpack.c.b16 %v522, %v516
        %v709 = vpack.c.b16 %v523, %v517
        %v710 = vpack.c.b16 %v524, %v518
        %v711 = vpack.c.b16 %v525, %v519
        %v712 = vpack.c.b16 %v526, %v520
        %v713 = vpack.c.b16 %v527, %v521
        %v714 = vpack.c.b16 %v534, %v528
        %v715 = vpack.c.b16 %v535, %v529
        %v716 = vpack.c.b16 %v536, %v530
        %v717 = vpack.c.b16 %v537, %v531
        %v718 = vpack.c.b16 %v538, %v532
        %v719 = vpack.c.b16 %v539, %v533
        %v720 = vpack.c.b16 %v546, %v540
        %v721 = vpack.c.b16 %v547, %v541
        %v722 = vpack.c.b16 %v548, %v542
        %v723 = vpack.c.b16 %v549, %v543
        %v724 = vpack.c.b16 %v550, %v544
        %v725 = vpack.c.b16 %v551, %v545
        %v726 = vpack.c.b16 %v558, %v552
        %v727 = vpack.c.b16 %v559, %v553
        %v728 = vpack.c.b16 %v560, %v554
        %v729 = vpack.c.b16 %v561, %v555
        %v730 = vpack.c.b16 %v562, %v556
        %v731 = vpack.c.b16 %v563, %v557
        %v732 = vpack.c.b16 %v570, %v564
        %v733 = vpack.c.b16 %v571, %v565
        %v734 = vpack.c.b16 %v572, %v566
        %v735 = vpack.c.b16 %v573, %v567
        %v736 = vpack.c.b16 %v574, %v568
        %v737 = vpack.c.b16 %v575, %v569
        %v738 = vpack.c.b16 %v582, %v576
        %v739 = vpack.c.b16 %v583, %v577
        %v740 = vpack.c.b16 %v584, %v578
        %v741 = vpack.c.b16 %v585, %v579
        %v742 = vpack.c.b16 %v586, %v580
        %v743 = vpack.c.b16 %v587, %v581
        %v744 = vpack.c.b16 %v594, %v588
        %v745 = vpack.c.b16 %v595, %v589
        %v746 = vpack.c.b16 %v596, %v590
        %v747 = vpack.c.b16 %v597, %v591
        %v748 = vpack.c.b16 %v598, %v592
        %v749 = vpack.c.b16 %v599, %v593
        %v750 = vpack.c.b16 %v606, %v600
        %v751 = vpack.c.b16 %v607, %v601
        %v752 = vpack.c.b16 %v608, %v602
        %v753 = vpack.c.b16 %v609, %v603
        %v754 = vpack.c.b16 %v610, %v604
        %v755 = vpack.c.b16 %v611, %v605
        %v756 = vpack.c.b16 %v618, %v612
        %v757 = vpack.c.b16 %v619, %v613
        %v758 = vpack.c.b16 %v620, %v614
        %v759 = vpack.c.b16 %v621, %v615
        %v760 = vpack.c.b16 %v622, %v616
        %v761 = vpack.c.b16 %v623, %v617
        %v762 = vpack.c.b16 %v630, %v624
        %v763 = vpack.c.b16 %v631, %v625
        %v764 = vpack.c.b16 %v632, %v626
        %v765 = vpack.c.b16 %v633, %v627
        %v766 = vpack.c.b16 %v634, %v628
        %v767 = vpack.c.b16 %v635, %v629
        %v768 = vpack.c.b16 %v642, %v636
        %v769 = vpack.c.b16 %v643, %v637
        %v770 = vpack.c.b16 %v644, %v638
        %v771 = vpack.c.b16 %v645, %v639
        %v772 = vpack.c.b16 %v646, %v640
        %v773 = vpack.c.b16 %v647, %v641
        %v774 = vpack.c.b16 %v654, %v648
        %v775 = vpack.c.b16 %v655, %v649
        %v776 = vpack.c.b16 %v656, %v650
        %v777 = vpack.c.b16 %v657, %v651
        %v778 = vpack.c.b16 %v658, %v652
        %v779 = vpack.c.b16 %v659, %v653
        %v780 = vpack.c.b16 %v666, %v660
        %v781 = vpack.c.b16 %v667, %v661
        %v782 = vpack.c.b16 %v668, %v662
        %v783 = vpack.c.b16 %v669, %v663
        %v784 = vpack.c.b16 %v670, %v664
        %v785 = vpack.c.b16 %v671, %v665
        %v786 = vpack.c.b16 %v678, %v672
        %v787 = vpack.c.b16 %v679, %v673
        %v788 = vpack.c.b16 %v680, %v674
        %v789 = vpack.c.b16 %v681, %v675
        %v790 = vpack.c.b16 %v682, %v676
        %v791 = vpack.c.b16 %v683, %v677
        %v792 = vpack.c.b16 %v690, %v684
        %v793 = vpack.c.b16 %v691, %v685
        %v794 = vpack.c.b16 %v692, %v686
        %v795 = vpack.c.b16 %v693, %v687
        %v796 = vpack.c.b16 %v694, %v688
        %v797 = vpack.c.b16 %v695, %v689
        %v798 = vpack.c.b16 %v702, %v696
        %v799 = vpack.c.b16 %v703, %v697
        %v800 = vpack.c.b16 %v704, %v698
        %v801 = vpack.c.b16 %v705, %v699
        %v802 = vpack.c.b16 %v706, %v700
        %v803 = vpack.c.b16 %v707, %v701
        %900 = vmatpush.bf16.msra.mxu0 %v750
        %901 = vmatpush.bf16.msra.mxu0 %v744
        %902 = vmatpush.bf16.msra.mxu0 %v738
        %903 = vmatpush.bf16.msra.mxu0 %v732
        %904 = vmatpush.bf16.msra.mxu0 %v726
        %905 = vmatpush.bf16.msra.mxu0 %v720
        %906 = vmatpush.bf16.msra.mxu0 %v714
        %907 = vmatpush.bf16.msra.mxu0 %v708
        %908 = vmatmul.bf16.gmra.mxu0 %v410
        %v909 = vpop.f32.mrf.mxu0
        %v910 = vadd.f32 0.0, %v909
        %v911 = vpop.f32.mrf.mxu0
        %912 = vdwg.mxu0
        %913 = vmatpush.bf16.msra.mxu0 %v798
        %914 = vmatpush.bf16.msra.mxu0 %v792
        %915 = vmatpush.bf16.msra.mxu0 %v786
        %916 = vmatpush.bf16.msra.mxu0 %v780
        %917 = vmatpush.bf16.msra.mxu0 %v774
        %918 = vmatpush.bf16.msra.mxu0 %v768
        %919 = vmatpush.bf16.msra.mxu0 %v762
        %920 = vmatpush.bf16.msra.mxu0 %v756
        %921 = vmatmul.bf16.gmra.mxu0 %v417
        %v922 = vpop.f32.mrf.mxu0
        %v923 = vadd.f32 %v910, %v922
        %v924 = vpop.f32.mrf.mxu0
        %925 = vdwg.mxu0
        %926 = vmatpush.bf16.msra.mxu0 %v751
        %927 = vmatpush.bf16.msra.mxu0 %v745
        %928 = vmatpush.bf16.msra.mxu0 %v739
        %929 = vmatpush.bf16.msra.mxu0 %v733
        %930 = vmatpush.bf16.msra.mxu0 %v727
        %931 = vmatpush.bf16.msra.mxu0 %v721
        %932 = vmatpush.bf16.msra.mxu0 %v715
        %933 = vmatpush.bf16.msra.mxu0 %v709
        %934 = vmatmul.bf16.gmra.mxu0 %v410
        %v935 = vpop.f32.mrf.mxu0
        %v936 = vadd.f32 0.0, %v935
        %v937 = vpop.f32.mrf.mxu0
        %938 = vdwg.mxu0
        %939 = vmatpush.bf16.msra.mxu0 %v799
        %940 = vmatpush.bf16.msra.mxu0 %v793
        %941 = vmatpush.bf16.msra.mxu0 %v787
        %942 = vmatpush.bf16.msra.mxu0 %v781
        %943 = vmatpush.bf16.msra.mxu0 %v775
        %944 = vmatpush.bf16.msra.mxu0 %v769
        %945 = vmatpush.bf16.msra.mxu0 %v763
        %946 = vmatpush.bf16.msra.mxu0 %v757
        %947 = vmatmul.bf16.gmra.mxu0 %v417
        %v948 = vpop.f32.mrf.mxu0
        %v949 = vadd.f32 %v936, %v948
        %v950 = vpop.f32.mrf.mxu0
        %951 = vdwg.mxu0
        %952 = vmatpush.bf16.msra.mxu0 %v752
        %953 = vmatpush.bf16.msra.mxu0 %v746
        %954 = vmatpush.bf16.msra.mxu0 %v740
        %955 = vmatpush.bf16.msra.mxu0 %v734
        %956 = vmatpush.bf16.msra.mxu0 %v728
        %957 = vmatpush.bf16.msra.mxu0 %v722
        %958 = vmatpush.bf16.msra.mxu0 %v716
        %959 = vmatpush.bf16.msra.mxu0 %v710
        %960 = vmatmul.bf16.gmra.mxu0 %v410
        %v961 = vpop.f32.mrf.mxu0
        %v962 = vadd.f32 0.0, %v961
        %v963 = vpop.f32.mrf.mxu0
        %964 = vdwg.mxu0
        %965 = vmatpush.bf16.msra.mxu0 %v800
        %966 = vmatpush.bf16.msra.mxu0 %v794
        %967 = vmatpush.bf16.msra.mxu0 %v788
        %968 = vmatpush.bf16.msra.mxu0 %v782
        %969 = vmatpush.bf16.msra.mxu0 %v776
        %970 = vmatpush.bf16.msra.mxu0 %v770
        %971 = vmatpush.bf16.msra.mxu0 %v764
        %972 = vmatpush.bf16.msra.mxu0 %v758
        %973 = vmatmul.bf16.gmra.mxu0 %v417
        %v974 = vpop.f32.mrf.mxu0
        %v975 = vadd.f32 %v962, %v974
        %v976 = vpop.f32.mrf.mxu0
        %977 = vdwg.mxu0
        %978 = vmatpush.bf16.msra.mxu0 %v753
        %979 = vmatpush.bf16.msra.mxu0 %v747
        %980 = vmatpush.bf16.msra.mxu0 %v741
        %981 = vmatpush.bf16.msra.mxu0 %v735
        %982 = vmatpush.bf16.msra.mxu0 %v729
        %983 = vmatpush.bf16.msra.mxu0 %v723
        %984 = vmatpush.bf16.msra.mxu0 %v717
        %985 = vmatpush.bf16.msra.mxu0 %v711
        %986 = vmatmul.bf16.gmra.mxu0 %v410
        %v987 = vpop.f32.mrf.mxu0
        %v988 = vadd.f32 0.0, %v987
        %v989 = vpop.f32.mrf.mxu0
        %990 = vdwg.mxu0
        %991 = vmatpush.bf16.msra.mxu0 %v801
        %992 = vmatpush.bf16.msra.mxu0 %v795
        %993 = vmatpush.bf16.msra.mxu0 %v789
        %994 = vmatpush.bf16.msra.mxu0 %v783
        %995 = vmatpush.bf16.msra.mxu0 %v777
        %996 = vmatpush.bf16.msra.mxu0 %v771
        %997 = vmatpush.bf16.msra.mxu0 %v765
        %998 = vmatpush.bf16.msra.mxu0 %v759
        %999 = vmatmul.bf16.gmra.mxu0 %v417
        %v1000 = vpop.f32.mrf.mxu0
        %v1001 = vadd.f32 %v988, %v1000
        %v1002 = vpop.f32.mrf.mxu0
        %1003 = vdwg.mxu0
        %1004 = vmatpush.bf16.msra.mxu0 %v754
        %1005 = vmatpush.bf16.msra.mxu0 %v748
        %1006 = vmatpush.bf16.msra.mxu0 %v742
        %1007 = vmatpush.bf16.msra.mxu0 %v736
        %1008 = vmatpush.bf16.msra.mxu0 %v730
        %1009 = vmatpush.bf16.msra.mxu0 %v724
        %1010 = vmatpush.bf16.msra.mxu0 %v718
        %1011 = vmatpush.bf16.msra.mxu0 %v712
        %1012 = vmatmul.bf16.gmra.mxu0 %v410
        %v1013 = vpop.f32.mrf.mxu0
        %v1014 = vadd.f32 0.0, %v1013
        %v1015 = vpop.f32.mrf.mxu0
        %1016 = vdwg.mxu0
        %1017 = vmatpush.bf16.msra.mxu0 %v802
        %1018 = vmatpush.bf16.msra.mxu0 %v796
        %1019 = vmatpush.bf16.msra.mxu0 %v790
        %1020 = vmatpush.bf16.msra.mxu0 %v784
        %1021 = vmatpush.bf16.msra.mxu0 %v778
        %1022 = vmatpush.bf16.msra.mxu0 %v772
        %1023 = vmatpush.bf16.msra.mxu0 %v766
        %1024 = vmatpush.bf16.msra.mxu0 %v760
        %1025 = vmatmul.bf16.gmra.mxu0 %v417
        %v1026 = vpop.f32.mrf.mxu0
        %v1027 = vadd.f32 %v1014, %v1026
        %v1028 = vpop.f32.mrf.mxu0
        %1029 = vdwg.mxu0
        %1030 = vmatpush.bf16.msra.mxu0 %v755
        %1031 = vmatpush.bf16.msra.mxu0 %v749
        %1032 = vmatpush.bf16.msra.mxu0 %v743
        %1033 = vmatpush.bf16.msra.mxu0 %v737
        %1034 = vmatpush.bf16.msra.mxu0 %v731
        %1035 = vmatpush.bf16.msra.mxu0 %v725
        %1036 = vmatpush.bf16.msra.mxu0 %v719
        %1037 = vmatpush.bf16.msra.mxu0 %v713
        %1038 = vmatmul.bf16.gmra.mxu0 %v410
        %v1039 = vpop.f32.mrf.mxu0
        %v1040 = vadd.f32 0.0, %v1039
        %v1041 = vpop.f32.mrf.mxu0
        %1042 = vdwg.mxu0
        %1043 = vmatpush.bf16.msra.mxu0 %v803
        %1044 = vmatpush.bf16.msra.mxu0 %v797
        %1045 = vmatpush.bf16.msra.mxu0 %v791
        %1046 = vmatpush.bf16.msra.mxu0 %v785
        %1047 = vmatpush.bf16.msra.mxu0 %v779
        %1048 = vmatpush.bf16.msra.mxu0 %v773
        %1049 = vmatpush.bf16.msra.mxu0 %v767
        %1050 = vmatpush.bf16.msra.mxu0 %v761
        %1051 = vmatmul.bf16.gmra.mxu0 %v417
        %v1052 = vpop.f32.mrf.mxu0
        %v1053 = vadd.f32 %v1040, %v1052
        %v1054 = vpop.f32.mrf.mxu0
        %1055 = vdwg.mxu0
        %v1152 = vunpack.c.l.b16 %v209
        %v1153 = vunpack.c.h.b16 %v209
        %v1154 = vunpack.c.l.b16 %v210
        %v1155 = vunpack.c.h.b16 %v210
        %v1156 = vunpack.c.l.b16 %v211
        %v1157 = vunpack.c.h.b16 %v211
        %v1158 = vunpack.c.l.b16 %v212
        %v1159 = vunpack.c.h.b16 %v212
        %v1160 = vunpack.c.l.b16 %v213
        %v1161 = vunpack.c.h.b16 %v213
        %v1162 = vunpack.c.l.b16 %v214
        %v1163 = vunpack.c.h.b16 %v214
        %v1164 = vunpack.c.l.b16 %v215
        %v1165 = vunpack.c.h.b16 %v215
        %v1166 = vunpack.c.l.b16 %v216
        %v1167 = vunpack.c.h.b16 %v216
        %v1168 = vunpack.c.l.b16 %v217
        %v1169 = vunpack.c.h.b16 %v217
        %v1170 = vunpack.c.l.b16 %v218
        %v1171 = vunpack.c.h.b16 %v218
        %v1172 = vunpack.c.l.b16 %v219
        %v1173 = vunpack.c.h.b16 %v219
        %v1174 = vunpack.c.l.b16 %v220
        %v1175 = vunpack.c.h.b16 %v220
        %v1176 = vunpack.c.l.b16 %v221
        %v1177 = vunpack.c.h.b16 %v221
        %v1178 = vunpack.c.l.b16 %v222
        %v1179 = vunpack.c.h.b16 %v222
        %v1180 = vunpack.c.l.b16 %v223
        %v1181 = vunpack.c.h.b16 %v223
        %v1182 = vunpack.c.l.b16 %v224
        %v1183 = vunpack.c.h.b16 %v224
        %v1184 = vunpack.c.l.b16 %v225
        %v1185 = vunpack.c.h.b16 %v225
        %v1186 = vunpack.c.l.b16 %v226
        %v1187 = vunpack.c.h.b16 %v226
        %v1188 = vunpack.c.l.b16 %v227
        %v1189 = vunpack.c.h.b16 %v227
        %v1190 = vunpack.c.l.b16 %v228
        %v1191 = vunpack.c.h.b16 %v228
        %v1192 = vunpack.c.l.b16 %v229
        %v1193 = vunpack.c.h.b16 %v229
        %v1194 = vunpack.c.l.b16 %v230
        %v1195 = vunpack.c.h.b16 %v230
        %v1196 = vunpack.c.l.b16 %v231
        %v1197 = vunpack.c.h.b16 %v231
        %v1198 = vunpack.c.l.b16 %v232
        %v1199 = vunpack.c.h.b16 %v232
        %v1200 = vunpack.c.l.b16 %v233
        %v1201 = vunpack.c.h.b16 %v233
        %v1202 = vunpack.c.l.b16 %v234
        %v1203 = vunpack.c.h.b16 %v234
        %v1204 = vunpack.c.l.b16 %v235
        %v1205 = vunpack.c.h.b16 %v235
        %v1206 = vunpack.c.l.b16 %v236
        %v1207 = vunpack.c.h.b16 %v236
        %v1208 = vunpack.c.l.b16 %v237
        %v1209 = vunpack.c.h.b16 %v237
        %v1210 = vunpack.c.l.b16 %v238
        %v1211 = vunpack.c.h.b16 %v238
        %v1212 = vunpack.c.l.b16 %v239
        %v1213 = vunpack.c.h.b16 %v239
        %v1214 = vunpack.c.l.b16 %v240
        %v1215 = vunpack.c.h.b16 %v240
        %v1216 = vunpack.c.l.b16 %v241
        %v1217 = vunpack.c.h.b16 %v241
        %v1218 = vunpack.c.l.b16 %v242
        %v1219 = vunpack.c.h.b16 %v242
        %v1220 = vunpack.c.l.b16 %v243
        %v1221 = vunpack.c.h.b16 %v243
        %v1222 = vunpack.c.l.b16 %v244
        %v1223 = vunpack.c.h.b16 %v244
        %v1224 = vunpack.c.l.b16 %v245
        %v1225 = vunpack.c.h.b16 %v245
        %v1226 = vunpack.c.l.b16 %v246
        %v1227 = vunpack.c.h.b16 %v246
        %v1228 = vunpack.c.l.b16 %v247
        %v1229 = vunpack.c.h.b16 %v247
        %v1230 = vunpack.c.l.b16 %v248
        %v1231 = vunpack.c.h.b16 %v248
        %v1232 = vunpack.c.l.b16 %v249
        %v1233 = vunpack.c.h.b16 %v249
        %v1234 = vunpack.c.l.b16 %v250
        %v1235 = vunpack.c.h.b16 %v250
        %v1236 = vunpack.c.l.b16 %v251
        %v1237 = vunpack.c.h.b16 %v251
        %v1238 = vunpack.c.l.b16 %v252
        %v1239 = vunpack.c.h.b16 %v252
        %v1240 = vunpack.c.l.b16 %v253
        %v1241 = vunpack.c.h.b16 %v253
        %v1242 = vunpack.c.l.b16 %v254
        %v1243 = vunpack.c.h.b16 %v254
        %v1244 = vunpack.c.l.b16 %v255
        %v1245 = vunpack.c.h.b16 %v255
        %v1246 = vunpack.c.l.b16 %v256
        %v1247 = vunpack.c.h.b16 %v256
        %v1248 = vunpack.c.l.b16 %v257
        %v1249 = vunpack.c.h.b16 %v257
        %v1250 = vunpack.c.l.b16 %v258
        %v1251 = vunpack.c.h.b16 %v258
        %v1252 = vunpack.c.l.b16 %v259
        %v1253 = vunpack.c.h.b16 %v259
        %v1254 = vunpack.c.l.b16 %v260
        %v1255 = vunpack.c.h.b16 %v260
        %v1256 = vunpack.c.l.b16 %v261
        %v1257 = vunpack.c.h.b16 %v261
        %v1258 = vunpack.c.l.b16 %v262
        %v1259 = vunpack.c.h.b16 %v262
        %v1260 = vunpack.c.l.b16 %v263
        %v1261 = vunpack.c.h.b16 %v263
        %v1262 = vunpack.c.l.b16 %v264
        %v1263 = vunpack.c.h.b16 %v264
        %v1264 = vunpack.c.l.b16 %v265
        %v1265 = vunpack.c.h.b16 %v265
        %v1266 = vunpack.c.l.b16 %v266
        %v1267 = vunpack.c.h.b16 %v266
        %v1268 = vunpack.c.l.b16 %v267
        %v1269 = vunpack.c.h.b16 %v267
        %v1270 = vunpack.c.l.b16 %v268
        %v1271 = vunpack.c.h.b16 %v268
        %v1272 = vunpack.c.l.b16 %v269
        %v1273 = vunpack.c.h.b16 %v269
        %v1274 = vunpack.c.l.b16 %v270
        %v1275 = vunpack.c.h.b16 %v270
        %v1276 = vunpack.c.l.b16 %v271
        %v1277 = vunpack.c.h.b16 %v271
        %v1278 = vunpack.c.l.b16 %v272
        %v1279 = vunpack.c.h.b16 %v272
        %v1280 = vunpack.c.l.b16 %v273
        %v1281 = vunpack.c.h.b16 %v273
        %v1282 = vunpack.c.l.b16 %v274
        %v1283 = vunpack.c.h.b16 %v274
        %v1284 = vunpack.c.l.b16 %v275
        %v1285 = vunpack.c.h.b16 %v275
        %v1286 = vunpack.c.l.b16 %v276
        %v1287 = vunpack.c.h.b16 %v276
        %v1288 = vunpack.c.l.b16 %v277
        %v1289 = vunpack.c.h.b16 %v277
        %v1290 = vunpack.c.l.b16 %v278
        %v1291 = vunpack.c.h.b16 %v278
        %v1292 = vunpack.c.l.b16 %v279
        %v1293 = vunpack.c.h.b16 %v279
        %v1294 = vunpack.c.l.b16 %v280
        %v1295 = vunpack.c.h.b16 %v280
        %v1296 = vunpack.c.l.b16 %v281
        %v1297 = vunpack.c.h.b16 %v281
        %v1298 = vunpack.c.l.b16 %v282
        %v1299 = vunpack.c.h.b16 %v282
        %v1300 = vunpack.c.l.b16 %v283
        %v1301 = vunpack.c.h.b16 %v283
        %v1302 = vunpack.c.l.b16 %v284
        %v1303 = vunpack.c.h.b16 %v284
        %v1304 = vunpack.c.l.b16 %v285
        %v1305 = vunpack.c.h.b16 %v285
        %v1306 = vunpack.c.l.b16 %v286
        %v1307 = vunpack.c.h.b16 %v286
        %v1308 = vunpack.c.l.b16 %v287
        %v1309 = vunpack.c.h.b16 %v287
        %v1310 = vunpack.c.l.b16 %v288
        %v1311 = vunpack.c.h.b16 %v288
        %v1312 = vunpack.c.l.b16 %v289
        %v1313 = vunpack.c.h.b16 %v289
        %v1314 = vunpack.c.l.b16 %v290
        %v1315 = vunpack.c.h.b16 %v290
        %v1316 = vunpack.c.l.b16 %v291
        %v1317 = vunpack.c.h.b16 %v291
        %v1318 = vunpack.c.l.b16 %v292
        %v1319 = vunpack.c.h.b16 %v292
        %v1320 = vunpack.c.l.b16 %v293
        %v1321 = vunpack.c.h.b16 %v293
        %v1322 = vunpack.c.l.b16 %v294
        %v1323 = vunpack.c.h.b16 %v294
        %v1324 = vunpack.c.l.b16 %v295
        %v1325 = vunpack.c.h.b16 %v295
        %v1326 = vunpack.c.l.b16 %v296
        %v1327 = vunpack.c.h.b16 %v296
        %v1328 = vunpack.c.l.b16 %v297
        %v1329 = vunpack.c.h.b16 %v297
        %v1330 = vunpack.c.l.b16 %v298
        %v1331 = vunpack.c.h.b16 %v298
        %v1332 = vunpack.c.l.b16 %v299
        %v1333 = vunpack.c.h.b16 %v299
        %v1334 = vunpack.c.l.b16 %v300
        %v1335 = vunpack.c.h.b16 %v300
        %v1336 = vunpack.c.l.b16 %v301
        %v1337 = vunpack.c.h.b16 %v301
        %v1338 = vunpack.c.l.b16 %v302
        %v1339 = vunpack.c.h.b16 %v302
        %v1340 = vunpack.c.l.b16 %v303
        %v1341 = vunpack.c.h.b16 %v303
        %v1342 = vunpack.c.l.b16 %v304
        %v1343 = vunpack.c.h.b16 %v304
        %v1344 = vpack.c.b16 %v1158, %v1152
        %v1345 = vpack.c.b16 %v1159, %v1153
        %v1346 = vpack.c.b16 %v1160, %v1154
        %v1347 = vpack.c.b16 %v1161, %v1155
        %v1348 = vpack.c.b16 %v1162, %v1156
        %v1349 = vpack.c.b16 %v1163, %v1157
        %v1350 = vpack.c.b16 %v1170, %v1164
        %v1351 = vpack.c.b16 %v1171, %v1165
        %v1352 = vpack.c.b16 %v1172, %v1166
        %v1353 = vpack.c.b16 %v1173, %v1167
        %v1354 = vpack.c.b16 %v1174, %v1168
        %v1355 = vpack.c.b16 %v1175, %v1169
        %v1356 = vpack.c.b16 %v1182, %v1176
        %v1357 = vpack.c.b16 %v1183, %v1177
        %v1358 = vpack.c.b16 %v1184, %v1178
        %v1359 = vpack.c.b16 %v1185, %v1179
        %v1360 = vpack.c.b16 %v1186, %v1180
        %v1361 = vpack.c.b16 %v1187, %v1181
        %v1362 = vpack.c.b16 %v1194, %v1188
        %v1363 = vpack.c.b16 %v1195, %v1189
        %v1364 = vpack.c.b16 %v1196, %v1190
        %v1365 = vpack.c.b16 %v1197, %v1191
        %v1366 = vpack.c.b16 %v1198, %v1192
        %v1367 = vpack.c.b16 %v1199, %v1193
        %v1368 = vpack.c.b16 %v1206, %v1200
        %v1369 = vpack.c.b16 %v1207, %v1201
        %v1370 = vpack.c.b16 %v1208, %v1202
        %v1371 = vpack.c.b16 %v1209, %v1203
        %v1372 = vpack.c.b16 %v1210, %v1204
        %v1373 = vpack.c.b16 %v1211, %v1205
        %v1374 = vpack.c.b16 %v1218, %v1212
        %v1375 = vpack.c.b16 %v1219, %v1213
        %v1376 = vpack.c.b16 %v1220, %v1214
        %v1377 = vpack.c.b16 %v1221, %v1215
        %v1378 = vpack.c.b16 %v1222, %v1216
        %v1379 = vpack.c.b16 %v1223, %v1217
        %v1380 = vpack.c.b16 %v1230, %v1224
        %v1381 = vpack.c.b16 %v1231, %v1225
        %v1382 = vpack.c.b16 %v1232, %v1226
        %v1383 = vpack.c.b16 %v1233, %v1227
        %v1384 = vpack.c.b16 %v1234, %v1228
        %v1385 = vpack.c.b16 %v1235, %v1229
        %v1386 = vpack.c.b16 %v1242, %v1236
        %v1387 = vpack.c.b16 %v1243, %v1237
        %v1388 = vpack.c.b16 %v1244, %v1238
        %v1389 = vpack.c.b16 %v1245, %v1239
        %v1390 = vpack.c.b16 %v1246, %v1240
        %v1391 = vpack.c.b16 %v1247, %v1241
        %v1392 = vpack.c.b16 %v1254, %v1248
        %v1393 = vpack.c.b16 %v1255, %v1249
        %v1394 = vpack.c.b16 %v1256, %v1250
        %v1395 = vpack.c.b16 %v1257, %v1251
        %v1396 = vpack.c.b16 %v1258, %v1252
        %v1397 = vpack.c.b16 %v1259, %v1253
        %v1398 = vpack.c.b16 %v1266, %v1260
        %v1399 = vpack.c.b16 %v1267, %v1261
        %v1400 = vpack.c.b16 %v1268, %v1262
        %v1401 = vpack.c.b16 %v1269, %v1263
        %v1402 = vpack.c.b16 %v1270, %v1264
        %v1403 = vpack.c.b16 %v1271, %v1265
        %v1404 = vpack.c.b16 %v1278, %v1272
        %v1405 = vpack.c.b16 %v1279, %v1273
        %v1406 = vpack.c.b16 %v1280, %v1274
        %v1407 = vpack.c.b16 %v1281, %v1275
        %v1408 = vpack.c.b16 %v1282, %v1276
        %v1409 = vpack.c.b16 %v1283, %v1277
        %v1410 = vpack.c.b16 %v1290, %v1284
        %v1411 = vpack.c.b16 %v1291, %v1285
        %v1412 = vpack.c.b16 %v1292, %v1286
        %v1413 = vpack.c.b16 %v1293, %v1287
        %v1414 = vpack.c.b16 %v1294, %v1288
        %v1415 = vpack.c.b16 %v1295, %v1289
        %v1416 = vpack.c.b16 %v1302, %v1296
        %v1417 = vpack.c.b16 %v1303, %v1297
        %v1418 = vpack.c.b16 %v1304, %v1298
        %v1419 = vpack.c.b16 %v1305, %v1299
        %v1420 = vpack.c.b16 %v1306, %v1300
        %v1421 = vpack.c.b16 %v1307, %v1301
        %v1422 = vpack.c.b16 %v1314, %v1308
        %v1423 = vpack.c.b16 %v1315, %v1309
        %v1424 = vpack.c.b16 %v1316, %v1310
        %v1425 = vpack.c.b16 %v1317, %v1311
        %v1426 = vpack.c.b16 %v1318, %v1312
        %v1427 = vpack.c.b16 %v1319, %v1313
        %v1428 = vpack.c.b16 %v1326, %v1320
        %v1429 = vpack.c.b16 %v1327, %v1321
        %v1430 = vpack.c.b16 %v1328, %v1322
        %v1431 = vpack.c.b16 %v1329, %v1323
        %v1432 = vpack.c.b16 %v1330, %v1324
        %v1433 = vpack.c.b16 %v1331, %v1325
        %v1434 = vpack.c.b16 %v1338, %v1332
        %v1435 = vpack.c.b16 %v1339, %v1333
        %v1436 = vpack.c.b16 %v1340, %v1334
        %v1437 = vpack.c.b16 %v1341, %v1335
        %v1438 = vpack.c.b16 %v1342, %v1336
        %v1439 = vpack.c.b16 %v1343, %v1337
        %1536 = vmatpush.bf16.msra.mxu0 %v1386
        %1537 = vmatpush.bf16.msra.mxu0 %v1380
        %1538 = vmatpush.bf16.msra.mxu0 %v1374
        %1539 = vmatpush.bf16.msra.mxu0 %v1368
        %1540 = vmatpush.bf16.msra.mxu0 %v1362
        %1541 = vmatpush.bf16.msra.mxu0 %v1356
        %1542 = vmatpush.bf16.msra.mxu0 %v1350
        %1543 = vmatpush.bf16.msra.mxu0 %v1344
        %1544 = vmatmul.bf16.gmra.mxu0 %v207
        %v1545 = vpop.f32.mrf.mxu0
        %v1546 = vadd.f32 %v923, %v1545
        %v1547 = vpop.f32.mrf.mxu0
        %1548 = vdwg.mxu0
        %1549 = vmatpush.bf16.msra.mxu0 %v1434
        %1550 = vmatpush.bf16.msra.mxu0 %v1428
        %1551 = vmatpush.bf16.msra.mxu0 %v1422
        %1552 = vmatpush.bf16.msra.mxu0 %v1416
        %1553 = vmatpush.bf16.msra.mxu0 %v1410
        %1554 = vmatpush.bf16.msra.mxu0 %v1404
        %1555 = vmatpush.bf16.msra.mxu0 %v1398
        %1556 = vmatpush.bf16.msra.mxu0 %v1392
        %1557 = vmatmul.bf16.gmra.mxu0 %v208
        %v1558 = vpop.f32.mrf.mxu0
        %v1559 = vadd.f32 %v1546, %v1558
        %v1560 = vpop.f32.mrf.mxu0
        %1561 = vdwg.mxu0
        %1562 = vmatpush.bf16.msra.mxu0 %v1387
        %1563 = vmatpush.bf16.msra.mxu0 %v1381
        %1564 = vmatpush.bf16.msra.mxu0 %v1375
        %1565 = vmatpush.bf16.msra.mxu0 %v1369
        %1566 = vmatpush.bf16.msra.mxu0 %v1363
        %1567 = vmatpush.bf16.msra.mxu0 %v1357
        %1568 = vmatpush.bf16.msra.mxu0 %v1351
        %1569 = vmatpush.bf16.msra.mxu0 %v1345
        %1570 = vmatmul.bf16.gmra.mxu0 %v207
        %v1571 = vpop.f32.mrf.mxu0
        %v1572 = vadd.f32 %v949, %v1571
        %v1573 = vpop.f32.mrf.mxu0
        %1574 = vdwg.mxu0
        %1575 = vmatpush.bf16.msra.mxu0 %v1435
        %1576 = vmatpush.bf16.msra.mxu0 %v1429
        %1577 = vmatpush.bf16.msra.mxu0 %v1423
        %1578 = vmatpush.bf16.msra.mxu0 %v1417
        %1579 = vmatpush.bf16.msra.mxu0 %v1411
        %1580 = vmatpush.bf16.msra.mxu0 %v1405
        %1581 = vmatpush.bf16.msra.mxu0 %v1399
        %1582 = vmatpush.bf16.msra.mxu0 %v1393
        %1583 = vmatmul.bf16.gmra.mxu0 %v208
        %v1584 = vpop.f32.mrf.mxu0
        %v1585 = vadd.f32 %v1572, %v1584
        %v1586 = vpop.f32.mrf.mxu0
        %1587 = vdwg.mxu0
        %1588 = vmatpush.bf16.msra.mxu0 %v1388
        %1589 = vmatpush.bf16.msra.mxu0 %v1382
        %1590 = vmatpush.bf16.msra.mxu0 %v1376
        %1591 = vmatpush.bf16.msra.mxu0 %v1370
        %1592 = vmatpush.bf16.msra.mxu0 %v1364
        %1593 = vmatpush.bf16.msra.mxu0 %v1358
        %1594 = vmatpush.bf16.msra.mxu0 %v1352
        %1595 = vmatpush.bf16.msra.mxu0 %v1346
        %1596 = vmatmul.bf16.gmra.mxu0 %v207
        %v1597 = vpop.f32.mrf.mxu0
        %v1598 = vadd.f32 %v975, %v1597
        %v1599 = vpop.f32.mrf.mxu0
        %1600 = vdwg.mxu0
        %1601 = vmatpush.bf16.msra.mxu0 %v1436
        %1602 = vmatpush.bf16.msra.mxu0 %v1430
        %1603 = vmatpush.bf16.msra.mxu0 %v1424
        %1604 = vmatpush.bf16.msra.mxu0 %v1418
        %1605 = vmatpush.bf16.msra.mxu0 %v1412
        %1606 = vmatpush.bf16.msra.mxu0 %v1406
        %1607 = vmatpush.bf16.msra.mxu0 %v1400
        %1608 = vmatpush.bf16.msra.mxu0 %v1394
        %1609 = vmatmul.bf16.gmra.mxu0 %v208
        %v1610 = vpop.f32.mrf.mxu0
        %v1611 = vadd.f32 %v1598, %v1610
        %v1612 = vpop.f32.mrf.mxu0
        %1613 = vdwg.mxu0
        %1614 = vmatpush.bf16.msra.mxu0 %v1389
        %1615 = vmatpush.bf16.msra.mxu0 %v1383
        %1616 = vmatpush.bf16.msra.mxu0 %v1377
        %1617 = vmatpush.bf16.msra.mxu0 %v1371
        %1618 = vmatpush.bf16.msra.mxu0 %v1365
        %1619 = vmatpush.bf16.msra.mxu0 %v1359
        %1620 = vmatpush.bf16.msra.mxu0 %v1353
        %1621 = vmatpush.bf16.msra.mxu0 %v1347
        %1622 = vmatmul.bf16.gmra.mxu0 %v207
        %v1623 = vpop.f32.mrf.mxu0
        %v1624 = vadd.f32 %v1001, %v1623
        %v1625 = vpop.f32.mrf.mxu0
        %1626 = vdwg.mxu0
        %1627 = vmatpush.bf16.msra.mxu0 %v1437
        %1628 = vmatpush.bf16.msra.mxu0 %v1431
        %1629 = vmatpush.bf16.msra.mxu0 %v1425
        %1630 = vmatpush.bf16.msra.mxu0 %v1419
        %1631 = vmatpush.bf16.msra.mxu0 %v1413
        %1632 = vmatpush.bf16.msra.mxu0 %v1407
        %1633 = vmatpush.bf16.msra.mxu0 %v1401
        %1634 = vmatpush.bf16.msra.mxu0 %v1395
        %1635 = vmatmul.bf16.gmra.mxu0 %v208
        %v1636 = vpop.f32.mrf.mxu0
        %v1637 = vadd.f32 %v1624, %v1636
        %v1638 = vpop.f32.mrf.mxu0
        %1639 = vdwg.mxu0
        %1640 = vmatpush.bf16.msra.mxu0 %v1390
        %1641 = vmatpush.bf16.msra.mxu0 %v1384
        %1642 = vmatpush.bf16.msra.mxu0 %v1378
        %1643 = vmatpush.bf16.msra.mxu0 %v1372
        %1644 = vmatpush.bf16.msra.mxu0 %v1366
        %1645 = vmatpush.bf16.msra.mxu0 %v1360
        %1646 = vmatpush.bf16.msra.mxu0 %v1354
        %1647 = vmatpush.bf16.msra.mxu0 %v1348
        %1648 = vmatmul.bf16.gmra.mxu0 %v207
        %v1649 = vpop.f32.mrf.mxu0
        %v1650 = vadd.f32 %v1027, %v1649
        %v1651 = vpop.f32.mrf.mxu0
        %1652 = vdwg.mxu0
        %1653 = vmatpush.bf16.msra.mxu0 %v1438
        %1654 = vmatpush.bf16.msra.mxu0 %v1432
        %1655 = vmatpush.bf16.msra.mxu0 %v1426
        %1656 = vmatpush.bf16.msra.mxu0 %v1420
        %1657 = vmatpush.bf16.msra.mxu0 %v1414
        %1658 = vmatpush.bf16.msra.mxu0 %v1408
        %1659 = vmatpush.bf16.msra.mxu0 %v1402
        %1660 = vmatpush.bf16.msra.mxu0 %v1396
        %1661 = vmatmul.bf16.gmra.mxu0 %v208
        %v1662 = vpop.f32.mrf.mxu0
        %v1663 = vadd.f32 %v1650, %v1662
        %v1664 = vpop.f32.mrf.mxu0
        %1665 = vdwg.mxu0
        %1666 = vmatpush.bf16.msra.mxu0 %v1391
        %1667 = vmatpush.bf16.msra.mxu0 %v1385
        %1668 = vmatpush.bf16.msra.mxu0 %v1379
        %1669 = vmatpush.bf16.msra.mxu0 %v1373
        %1670 = vmatpush.bf16.msra.mxu0 %v1367
        %1671 = vmatpush.bf16.msra.mxu0 %v1361
        %1672 = vmatpush.bf16.msra.mxu0 %v1355
        %1673 = vmatpush.bf16.msra.mxu0 %v1349
        %1674 = vmatmul.bf16.gmra.mxu0 %v207
        %v1675 = vpop.f32.mrf.mxu0
        %v1676 = vadd.f32 %v1053, %v1675
        %v1677 = vpop.f32.mrf.mxu0
        %1678 = vdwg.mxu0
        %1679 = vmatpush.bf16.msra.mxu0 %v1439
        %1680 = vmatpush.bf16.msra.mxu0 %v1433
        %1681 = vmatpush.bf16.msra.mxu0 %v1427
        %1682 = vmatpush.bf16.msra.mxu0 %v1421
        %1683 = vmatpush.bf16.msra.mxu0 %v1415
        %1684 = vmatpush.bf16.msra.mxu0 %v1409
        %1685 = vmatpush.bf16.msra.mxu0 %v1403
        %1686 = vmatpush.bf16.msra.mxu0 %v1397
        %1687 = vmatmul.bf16.gmra.mxu0 %v208
        %v1688 = vpop.f32.mrf.mxu0
        %v1689 = vadd.f32 %v1676, %v1688
        %v1690 = vpop.f32.mrf.mxu0
        %1691 = vdwg.mxu0
        %s1692 = scalar_lea.vmem [#allocation2], 1536
        %v1693 = vld [vmem:[%s1692] sm:$0xff]
        %v1694 = vld [vmem:[%s1692 + $0x8] sm:$0xff]
        %v1695 = vld [vmem:[%s1692 + $0x10] sm:$0xff]
        %v1696 = vld [vmem:[%s1692 + $0x18] sm:$0xff]
        %v1697 = vld [vmem:[%s1692 + $0x20] sm:$0xff]
        %v1698 = vld [vmem:[%s1692 + $0x28] sm:$0xff]
        %v1699 = vld [vmem:[%s1692 + $0x30] sm:$0xff]
        %v1700 = vld [vmem:[%s1692 + $0x38] sm:$0xff]
        %v1701 = vld [vmem:[%s1692 + $0x40] sm:$0xff]
        %v1702 = vld [vmem:[%s1692 + $0x48] sm:$0xff]
        %v1703 = vld [vmem:[%s1692 + $0x50] sm:$0xff]
        %v1704 = vld [vmem:[%s1692 + $0x58] sm:$0xff]
        %v1705 = vld [vmem:[%s1692 + $0x60] sm:$0xff]
        %v1706 = vld [vmem:[%s1692 + $0x68] sm:$0xff]
        %v1707 = vld [vmem:[%s1692 + $0x70] sm:$0xff]
        %v1708 = vld [vmem:[%s1692 + $0x78] sm:$0xff]
        %v1709 = vld [vmem:[%s1692 + $0x80] sm:$0xff]
        %v1710 = vld [vmem:[%s1692 + $0x88] sm:$0xff]
        %v1711 = vld [vmem:[%s1692 + $0x90] sm:$0xff]
        %v1712 = vld [vmem:[%s1692 + $0x98] sm:$0xff]
        %v1713 = vld [vmem:[%s1692 + $0xa0] sm:$0xff]
        %v1714 = vld [vmem:[%s1692 + $0xa8] sm:$0xff]
        %v1715 = vld [vmem:[%s1692 + $0xb0] sm:$0xff]
        %v1716 = vld [vmem:[%s1692 + $0xb8] sm:$0xff]
        %v1717 = vld [vmem:[%s1692 + $0xc0] sm:$0xff]
        %v1718 = vld [vmem:[%s1692 + $0xc8] sm:$0xff]
        %v1719 = vld [vmem:[%s1692 + $0xd0] sm:$0xff]
        %v1720 = vld [vmem:[%s1692 + $0xd8] sm:$0xff]
        %v1721 = vld [vmem:[%s1692 + $0xe0] sm:$0xff]
        %v1722 = vld [vmem:[%s1692 + $0xe8] sm:$0xff]
        %v1723 = vld [vmem:[%s1692 + $0xf0] sm:$0xff]
        %v1724 = vld [vmem:[%s1692 + $0xf8] sm:$0xff]
        %v1725 = vld [vmem:[%s1692 + $0x100] sm:$0xff]
        %v1726 = vld [vmem:[%s1692 + $0x108] sm:$0xff]
        %v1727 = vld [vmem:[%s1692 + $0x110] sm:$0xff]
        %v1728 = vld [vmem:[%s1692 + $0x118] sm:$0xff]
        %v1729 = vld [vmem:[%s1692 + $0x120] sm:$0xff]
        %v1730 = vld [vmem:[%s1692 + $0x128] sm:$0xff]
        %v1731 = vld [vmem:[%s1692 + $0x130] sm:$0xff]
        %v1732 = vld [vmem:[%s1692 + $0x138] sm:$0xff]
        %v1733 = vld [vmem:[%s1692 + $0x140] sm:$0xff]
        %v1734 = vld [vmem:[%s1692 + $0x148] sm:$0xff]
        %v1735 = vld [vmem:[%s1692 + $0x150] sm:$0xff]
        %v1736 = vld [vmem:[%s1692 + $0x158] sm:$0xff]
        %v1737 = vld [vmem:[%s1692 + $0x160] sm:$0xff]
        %v1738 = vld [vmem:[%s1692 + $0x168] sm:$0xff]
        %v1739 = vld [vmem:[%s1692 + $0x170] sm:$0xff]
        %v1740 = vld [vmem:[%s1692 + $0x178] sm:$0xff]
        %v1741 = vld [vmem:[%s1692 + $0x180] sm:$0xff]
        %v1742 = vld [vmem:[%s1692 + $0x188] sm:$0xff]
        %v1743 = vld [vmem:[%s1692 + $0x190] sm:$0xff]
        %v1744 = vld [vmem:[%s1692 + $0x198] sm:$0xff]
        %v1745 = vld [vmem:[%s1692 + $0x1a0] sm:$0xff]
        %v1746 = vld [vmem:[%s1692 + $0x1a8] sm:$0xff]
        %v1747 = vld [vmem:[%s1692 + $0x1b0] sm:$0xff]
        %v1748 = vld [vmem:[%s1692 + $0x1b8] sm:$0xff]
        %v1749 = vld [vmem:[%s1692 + $0x1c0] sm:$0xff]
        %v1750 = vld [vmem:[%s1692 + $0x1c8] sm:$0xff]
        %v1751 = vld [vmem:[%s1692 + $0x1d0] sm:$0xff]
        %v1752 = vld [vmem:[%s1692 + $0x1d8] sm:$0xff]
        %v1753 = vld [vmem:[%s1692 + $0x1e0] sm:$0xff]
        %v1754 = vld [vmem:[%s1692 + $0x1e8] sm:$0xff]
        %v1755 = vld [vmem:[%s1692 + $0x1f0] sm:$0xff]
        %v1756 = vld [vmem:[%s1692 + $0x1f8] sm:$0xff]
        %v1757 = vld [vmem:[%s1692 + $0x200] sm:$0xff]
        %v1758 = vld [vmem:[%s1692 + $0x208] sm:$0xff]
        %v1759 = vld [vmem:[%s1692 + $0x210] sm:$0xff]
        %v1760 = vld [vmem:[%s1692 + $0x218] sm:$0xff]
        %v1761 = vld [vmem:[%s1692 + $0x220] sm:$0xff]
        %v1762 = vld [vmem:[%s1692 + $0x228] sm:$0xff]
        %v1763 = vld [vmem:[%s1692 + $0x230] sm:$0xff]
        %v1764 = vld [vmem:[%s1692 + $0x238] sm:$0xff]
        %v1765 = vld [vmem:[%s1692 + $0x240] sm:$0xff]
        %v1766 = vld [vmem:[%s1692 + $0x248] sm:$0xff]
        %v1767 = vld [vmem:[%s1692 + $0x250] sm:$0xff]
        %v1768 = vld [vmem:[%s1692 + $0x258] sm:$0xff]
        %v1769 = vld [vmem:[%s1692 + $0x260] sm:$0xff]
        %v1770 = vld [vmem:[%s1692 + $0x268] sm:$0xff]
        %v1771 = vld [vmem:[%s1692 + $0x270] sm:$0xff]
        %v1772 = vld [vmem:[%s1692 + $0x278] sm:$0xff]
        %v1773 = vld [vmem:[%s1692 + $0x280] sm:$0xff]
        %v1774 = vld [vmem:[%s1692 + $0x288] sm:$0xff]
        %v1775 = vld [vmem:[%s1692 + $0x290] sm:$0xff]
        %v1776 = vld [vmem:[%s1692 + $0x298] sm:$0xff]
        %v1777 = vld [vmem:[%s1692 + $0x2a0] sm:$0xff]
        %v1778 = vld [vmem:[%s1692 + $0x2a8] sm:$0xff]
        %v1779 = vld [vmem:[%s1692 + $0x2b0] sm:$0xff]
        %v1780 = vld [vmem:[%s1692 + $0x2b8] sm:$0xff]
        %v1781 = vld [vmem:[%s1692 + $0x2c0] sm:$0xff]
        %v1782 = vld [vmem:[%s1692 + $0x2c8] sm:$0xff]
        %v1783 = vld [vmem:[%s1692 + $0x2d0] sm:$0xff]
        %v1784 = vld [vmem:[%s1692 + $0x2d8] sm:$0xff]
        %v1785 = vld [vmem:[%s1692 + $0x2e0] sm:$0xff]
        %v1786 = vld [vmem:[%s1692 + $0x2e8] sm:$0xff]
        %v1787 = vld [vmem:[%s1692 + $0x2f0] sm:$0xff]
        %v1788 = vld [vmem:[%s1692 + $0x2f8] sm:$0xff]
        %v1791 = vrot.slane %v305, 1
        %v1792 = vrot.slane %v306, 1
        %v1891 = vunpack.c.l.b16 %v1693
        %v1892 = vunpack.c.h.b16 %v1693
        %v1893 = vunpack.c.l.b16 %v1694
        %v1894 = vunpack.c.h.b16 %v1694
        %v1895 = vunpack.c.l.b16 %v1695
        %v1896 = vunpack.c.h.b16 %v1695
        %v1897 = vunpack.c.l.b16 %v1696
        %v1898 = vunpack.c.h.b16 %v1696
        %v1899 = vunpack.c.l.b16 %v1697
        %v1900 = vunpack.c.h.b16 %v1697
        %v1901 = vunpack.c.l.b16 %v1698
        %v1902 = vunpack.c.h.b16 %v1698
        %v1903 = vunpack.c.l.b16 %v1699
        %v1904 = vunpack.c.h.b16 %v1699
        %v1905 = vunpack.c.l.b16 %v1700
        %v1906 = vunpack.c.h.b16 %v1700
        %v1907 = vunpack.c.l.b16 %v1701
        %v1908 = vunpack.c.h.b16 %v1701
        %v1909 = vunpack.c.l.b16 %v1702
        %v1910 = vunpack.c.h.b16 %v1702
        %v1911 = vunpack.c.l.b16 %v1703
        %v1912 = vunpack.c.h.b16 %v1703
        %v1913 = vunpack.c.l.b16 %v1704
        %v1914 = vunpack.c.h.b16 %v1704
        %v1915 = vunpack.c.l.b16 %v1705
        %v1916 = vunpack.c.h.b16 %v1705
        %v1917 = vunpack.c.l.b16 %v1706
        %v1918 = vunpack.c.h.b16 %v1706
        %v1919 = vunpack.c.l.b16 %v1707
        %v1920 = vunpack.c.h.b16 %v1707
        %v1921 = vunpack.c.l.b16 %v1708
        %v1922 = vunpack.c.h.b16 %v1708
        %v1923 = vunpack.c.l.b16 %v1709
        %v1924 = vunpack.c.h.b16 %v1709
        %v1925 = vunpack.c.l.b16 %v1710
        %v1926 = vunpack.c.h.b16 %v1710
        %v1927 = vunpack.c.l.b16 %v1711
        %v1928 = vunpack.c.h.b16 %v1711
        %v1929 = vunpack.c.l.b16 %v1712
        %v1930 = vunpack.c.h.b16 %v1712
        %v1931 = vunpack.c.l.b16 %v1713
        %v1932 = vunpack.c.h.b16 %v1713
        %v1933 = vunpack.c.l.b16 %v1714
        %v1934 = vunpack.c.h.b16 %v1714
        %v1935 = vunpack.c.l.b16 %v1715
        %v1936 = vunpack.c.h.b16 %v1715
        %v1937 = vunpack.c.l.b16 %v1716
        %v1938 = vunpack.c.h.b16 %v1716
        %v1939 = vunpack.c.l.b16 %v1717
        %v1940 = vunpack.c.h.b16 %v1717
        %v1941 = vunpack.c.l.b16 %v1718
        %v1942 = vunpack.c.h.b16 %v1718
        %v1943 = vunpack.c.l.b16 %v1719
        %v1944 = vunpack.c.h.b16 %v1719
        %v1945 = vunpack.c.l.b16 %v1720
        %v1946 = vunpack.c.h.b16 %v1720
        %v1947 = vunpack.c.l.b16 %v1721
        %v1948 = vunpack.c.h.b16 %v1721
        %v1949 = vunpack.c.l.b16 %v1722
        %v1950 = vunpack.c.h.b16 %v1722
        %v1951 = vunpack.c.l.b16 %v1723
        %v1952 = vunpack.c.h.b16 %v1723
        %v1953 = vunpack.c.l.b16 %v1724
        %v1954 = vunpack.c.h.b16 %v1724
        %v1955 = vunpack.c.l.b16 %v1725
        %v1956 = vunpack.c.h.b16 %v1725
        %v1957 = vunpack.c.l.b16 %v1726
        %v1958 = vunpack.c.h.b16 %v1726
        %v1959 = vunpack.c.l.b16 %v1727
        %v1960 = vunpack.c.h.b16 %v1727
        %v1961 = vunpack.c.l.b16 %v1728
        %v1962 = vunpack.c.h.b16 %v1728
        %v1963 = vunpack.c.l.b16 %v1729
        %v1964 = vunpack.c.h.b16 %v1729
        %v1965 = vunpack.c.l.b16 %v1730
        %v1966 = vunpack.c.h.b16 %v1730
        %v1967 = vunpack.c.l.b16 %v1731
        %v1968 = vunpack.c.h.b16 %v1731
        %v1969 = vunpack.c.l.b16 %v1732
        %v1970 = vunpack.c.h.b16 %v1732
        %v1971 = vunpack.c.l.b16 %v1733
        %v1972 = vunpack.c.h.b16 %v1733
        %v1973 = vunpack.c.l.b16 %v1734
        %v1974 = vunpack.c.h.b16 %v1734
        %v1975 = vunpack.c.l.b16 %v1735
        %v1976 = vunpack.c.h.b16 %v1735
        %v1977 = vunpack.c.l.b16 %v1736
        %v1978 = vunpack.c.h.b16 %v1736
        %v1979 = vunpack.c.l.b16 %v1737
        %v1980 = vunpack.c.h.b16 %v1737
        %v1981 = vunpack.c.l.b16 %v1738
        %v1982 = vunpack.c.h.b16 %v1738
        %v1983 = vunpack.c.l.b16 %v1739
        %v1984 = vunpack.c.h.b16 %v1739
        %v1985 = vunpack.c.l.b16 %v1740
        %v1986 = vunpack.c.h.b16 %v1740
        %v1987 = vunpack.c.l.b16 %v1741
        %v1988 = vunpack.c.h.b16 %v1741
        %v1989 = vunpack.c.l.b16 %v1742
        %v1990 = vunpack.c.h.b16 %v1742
        %v1991 = vunpack.c.l.b16 %v1743
        %v1992 = vunpack.c.h.b16 %v1743
        %v1993 = vunpack.c.l.b16 %v1744
        %v1994 = vunpack.c.h.b16 %v1744
        %v1995 = vunpack.c.l.b16 %v1745
        %v1996 = vunpack.c.h.b16 %v1745
        %v1997 = vunpack.c.l.b16 %v1746
        %v1998 = vunpack.c.h.b16 %v1746
        %v1999 = vunpack.c.l.b16 %v1747
        %v2000 = vunpack.c.h.b16 %v1747
        %v2001 = vunpack.c.l.b16 %v1748
        %v2002 = vunpack.c.h.b16 %v1748
        %v2003 = vunpack.c.l.b16 %v1749
        %v2004 = vunpack.c.h.b16 %v1749
        %v2005 = vunpack.c.l.b16 %v1750
        %v2006 = vunpack.c.h.b16 %v1750
        %v2007 = vunpack.c.l.b16 %v1751
        %v2008 = vunpack.c.h.b16 %v1751
        %v2009 = vunpack.c.l.b16 %v1752
        %v2010 = vunpack.c.h.b16 %v1752
        %v2011 = vunpack.c.l.b16 %v1753
        %v2012 = vunpack.c.h.b16 %v1753
        %v2013 = vunpack.c.l.b16 %v1754
        %v2014 = vunpack.c.h.b16 %v1754
        %v2015 = vunpack.c.l.b16 %v1755
        %v2016 = vunpack.c.h.b16 %v1755
        %v2017 = vunpack.c.l.b16 %v1756
        %v2018 = vunpack.c.h.b16 %v1756
        %v2019 = vunpack.c.l.b16 %v1757
        %v2020 = vunpack.c.h.b16 %v1757
        %v2021 = vunpack.c.l.b16 %v1758
        %v2022 = vunpack.c.h.b16 %v1758
        %v2023 = vunpack.c.l.b16 %v1759
        %v2024 = vunpack.c.h.b16 %v1759
        %v2025 = vunpack.c.l.b16 %v1760
        %v2026 = vunpack.c.h.b16 %v1760
        %v2027 = vunpack.c.l.b16 %v1761
        %v2028 = vunpack.c.h.b16 %v1761
        %v2029 = vunpack.c.l.b16 %v1762
        %v2030 = vunpack.c.h.b16 %v1762
        %v2031 = vunpack.c.l.b16 %v1763
        %v2032 = vunpack.c.h.b16 %v1763
        %v2033 = vunpack.c.l.b16 %v1764
        %v2034 = vunpack.c.h.b16 %v1764
        %v2035 = vunpack.c.l.b16 %v1765
        %v2036 = vunpack.c.h.b16 %v1765
        %v2037 = vunpack.c.l.b16 %v1766
        %v2038 = vunpack.c.h.b16 %v1766
        %v2039 = vunpack.c.l.b16 %v1767
        %v2040 = vunpack.c.h.b16 %v1767
        %v2041 = vunpack.c.l.b16 %v1768
        %v2042 = vunpack.c.h.b16 %v1768
        %v2043 = vunpack.c.l.b16 %v1769
        %v2044 = vunpack.c.h.b16 %v1769
        %v2045 = vunpack.c.l.b16 %v1770
        %v2046 = vunpack.c.h.b16 %v1770
        %v2047 = vunpack.c.l.b16 %v1771
        %v2048 = vunpack.c.h.b16 %v1771
        %v2049 = vunpack.c.l.b16 %v1772
        %v2050 = vunpack.c.h.b16 %v1772
        %v2051 = vunpack.c.l.b16 %v1773
        %v2052 = vunpack.c.h.b16 %v1773
        %v2053 = vunpack.c.l.b16 %v1774
        %v2054 = vunpack.c.h.b16 %v1774
        %v2055 = vunpack.c.l.b16 %v1775
        %v2056 = vunpack.c.h.b16 %v1775
        %v2057 = vunpack.c.l.b16 %v1776
        %v2058 = vunpack.c.h.b16 %v1776
        %v2059 = vunpack.c.l.b16 %v1777
        %v2060 = vunpack.c.h.b16 %v1777
        %v2061 = vunpack.c.l.b16 %v1778
        %v2062 = vunpack.c.h.b16 %v1778
        %v2063 = vunpack.c.l.b16 %v1779
        %v2064 = vunpack.c.h.b16 %v1779
        %v2065 = vunpack.c.l.b16 %v1780
        %v2066 = vunpack.c.h.b16 %v1780
        %v2067 = vunpack.c.l.b16 %v1781
        %v2068 = vunpack.c.h.b16 %v1781
        %v2069 = vunpack.c.l.b16 %v1782
        %v2070 = vunpack.c.h.b16 %v1782
        %v2071 = vunpack.c.l.b16 %v1783
        %v2072 = vunpack.c.h.b16 %v1783
        %v2073 = vunpack.c.l.b16 %v1784
        %v2074 = vunpack.c.h.b16 %v1784
        %v2075 = vunpack.c.l.b16 %v1785
        %v2076 = vunpack.c.h.b16 %v1785
        %v2077 = vunpack.c.l.b16 %v1786
        %v2078 = vunpack.c.h.b16 %v1786
        %v2079 = vunpack.c.l.b16 %v1787
        %v2080 = vunpack.c.h.b16 %v1787
        %v2081 = vunpack.c.l.b16 %v1788
        %v2082 = vunpack.c.h.b16 %v1788
        %v2083 = vpack.c.b16 %v1897, %v1891
        %v2084 = vpack.c.b16 %v1898, %v1892
        %v2085 = vpack.c.b16 %v1899, %v1893
        %v2086 = vpack.c.b16 %v1900, %v1894
        %v2087 = vpack.c.b16 %v1901, %v1895
        %v2088 = vpack.c.b16 %v1902, %v1896
        %v2089 = vpack.c.b16 %v1909, %v1903
        %v2090 = vpack.c.b16 %v1910, %v1904
        %v2091 = vpack.c.b16 %v1911, %v1905
        %v2092 = vpack.c.b16 %v1912, %v1906
        %v2093 = vpack.c.b16 %v1913, %v1907
        %v2094 = vpack.c.b16 %v1914, %v1908
        %v2095 = vpack.c.b16 %v1921, %v1915
        %v2096 = vpack.c.b16 %v1922, %v1916
        %v2097 = vpack.c.b16 %v1923, %v1917
        %v2098 = vpack.c.b16 %v1924, %v1918
        %v2099 = vpack.c.b16 %v1925, %v1919
        %v2100 = vpack.c.b16 %v1926, %v1920
        %v2101 = vpack.c.b16 %v1933, %v1927
        %v2102 = vpack.c.b16 %v1934, %v1928
        %v2103 = vpack.c.b16 %v1935, %v1929
        %v2104 = vpack.c.b16 %v1936, %v1930
        %v2105 = vpack.c.b16 %v1937, %v1931
        %v2106 = vpack.c.b16 %v1938, %v1932
        %v2107 = vpack.c.b16 %v1945, %v1939
        %v2108 = vpack.c.b16 %v1946, %v1940
        %v2109 = vpack.c.b16 %v1947, %v1941
        %v2110 = vpack.c.b16 %v1948, %v1942
        %v2111 = vpack.c.b16 %v1949, %v1943
        %v2112 = vpack.c.b16 %v1950, %v1944
        %v2113 = vpack.c.b16 %v1957, %v1951
        %v2114 = vpack.c.b16 %v1958, %v1952
        %v2115 = vpack.c.b16 %v1959, %v1953
        %v2116 = vpack.c.b16 %v1960, %v1954
        %v2117 = vpack.c.b16 %v1961, %v1955
        %v2118 = vpack.c.b16 %v1962, %v1956
        %v2119 = vpack.c.b16 %v1969, %v1963
        %v2120 = vpack.c.b16 %v1970, %v1964
        %v2121 = vpack.c.b16 %v1971, %v1965
        %v2122 = vpack.c.b16 %v1972, %v1966
        %v2123 = vpack.c.b16 %v1973, %v1967
        %v2124 = vpack.c.b16 %v1974, %v1968
        %v2125 = vpack.c.b16 %v1981, %v1975
        %v2126 = vpack.c.b16 %v1982, %v1976
        %v2127 = vpack.c.b16 %v1983, %v1977
        %v2128 = vpack.c.b16 %v1984, %v1978
        %v2129 = vpack.c.b16 %v1985, %v1979
        %v2130 = vpack.c.b16 %v1986, %v1980
        %v2131 = vpack.c.b16 %v1993, %v1987
        %v2132 = vpack.c.b16 %v1994, %v1988
        %v2133 = vpack.c.b16 %v1995, %v1989
        %v2134 = vpack.c.b16 %v1996, %v1990
        %v2135 = vpack.c.b16 %v1997, %v1991
        %v2136 = vpack.c.b16 %v1998, %v1992
        %v2137 = vpack.c.b16 %v2005, %v1999
        %v2138 = vpack.c.b16 %v2006, %v2000
        %v2139 = vpack.c.b16 %v2007, %v2001
        %v2140 = vpack.c.b16 %v2008, %v2002
        %v2141 = vpack.c.b16 %v2009, %v2003
        %v2142 = vpack.c.b16 %v2010, %v2004
        %v2143 = vpack.c.b16 %v2017, %v2011
        %v2144 = vpack.c.b16 %v2018, %v2012
        %v2145 = vpack.c.b16 %v2019, %v2013
        %v2146 = vpack.c.b16 %v2020, %v2014
        %v2147 = vpack.c.b16 %v2021, %v2015
        %v2148 = vpack.c.b16 %v2022, %v2016
        %v2149 = vpack.c.b16 %v2029, %v2023
        %v2150 = vpack.c.b16 %v2030, %v2024
        %v2151 = vpack.c.b16 %v2031, %v2025
        %v2152 = vpack.c.b16 %v2032, %v2026
        %v2153 = vpack.c.b16 %v2033, %v2027
        %v2154 = vpack.c.b16 %v2034, %v2028
        %v2155 = vpack.c.b16 %v2041, %v2035
        %v2156 = vpack.c.b16 %v2042, %v2036
        %v2157 = vpack.c.b16 %v2043, %v2037
        %v2158 = vpack.c.b16 %v2044, %v2038
        %v2159 = vpack.c.b16 %v2045, %v2039
        %v2160 = vpack.c.b16 %v2046, %v2040
        %v2161 = vpack.c.b16 %v2053, %v2047
        %v2162 = vpack.c.b16 %v2054, %v2048
        %v2163 = vpack.c.b16 %v2055, %v2049
        %v2164 = vpack.c.b16 %v2056, %v2050
        %v2165 = vpack.c.b16 %v2057, %v2051
        %v2166 = vpack.c.b16 %v2058, %v2052
        %v2167 = vpack.c.b16 %v2065, %v2059
        %v2168 = vpack.c.b16 %v2066, %v2060
        %v2169 = vpack.c.b16 %v2067, %v2061
        %v2170 = vpack.c.b16 %v2068, %v2062
        %v2171 = vpack.c.b16 %v2069, %v2063
        %v2172 = vpack.c.b16 %v2070, %v2064
        %v2173 = vpack.c.b16 %v2077, %v2071
        %v2174 = vpack.c.b16 %v2078, %v2072
        %v2175 = vpack.c.b16 %v2079, %v2073
        %v2176 = vpack.c.b16 %v2080, %v2074
        %v2177 = vpack.c.b16 %v2081, %v2075
        %v2178 = vpack.c.b16 %v2082, %v2076
        %2275 = vmatpush.bf16.msra.mxu0 %v2125
        %2276 = vmatpush.bf16.msra.mxu0 %v2119
        %2277 = vmatpush.bf16.msra.mxu0 %v2113
        %2278 = vmatpush.bf16.msra.mxu0 %v2107
        %2279 = vmatpush.bf16.msra.mxu0 %v2101
        %2280 = vmatpush.bf16.msra.mxu0 %v2095
        %2281 = vmatpush.bf16.msra.mxu0 %v2089
        %2282 = vmatpush.bf16.msra.mxu0 %v2083
        %2283 = vmatmul.bf16.gmra.mxu0 %v1791
        %v2284 = vpop.f32.mrf.mxu0
        %v2285 = vadd.f32 0.0, %v2284
        %v2286 = vpop.f32.mrf.mxu0
        %2287 = vdwg.mxu0
        %2288 = vmatpush.bf16.msra.mxu0 %v2173
        %2289 = vmatpush.bf16.msra.mxu0 %v2167
        %2290 = vmatpush.bf16.msra.mxu0 %v2161
        %2291 = vmatpush.bf16.msra.mxu0 %v2155
        %2292 = vmatpush.bf16.msra.mxu0 %v2149
        %2293 = vmatpush.bf16.msra.mxu0 %v2143
        %2294 = vmatpush.bf16.msra.mxu0 %v2137
        %2295 = vmatpush.bf16.msra.mxu0 %v2131
        %2296 = vmatmul.bf16.gmra.mxu0 %v1792
        %v2297 = vpop.f32.mrf.mxu0
        %v2298 = vadd.f32 %v2285, %v2297
        %v2299 = vpop.f32.mrf.mxu0
        %2300 = vdwg.mxu0
        %2301 = vmatpush.bf16.msra.mxu0 %v2126
        %2302 = vmatpush.bf16.msra.mxu0 %v2120
        %2303 = vmatpush.bf16.msra.mxu0 %v2114
        %2304 = vmatpush.bf16.msra.mxu0 %v2108
        %2305 = vmatpush.bf16.msra.mxu0 %v2102
        %2306 = vmatpush.bf16.msra.mxu0 %v2096
        %2307 = vmatpush.bf16.msra.mxu0 %v2090
        %2308 = vmatpush.bf16.msra.mxu0 %v2084
        %2309 = vmatmul.bf16.gmra.mxu0 %v1791
        %v2310 = vpop.f32.mrf.mxu0
        %v2311 = vadd.f32 0.0, %v2310
        %v2312 = vpop.f32.mrf.mxu0
        %2313 = vdwg.mxu0
        %2314 = vmatpush.bf16.msra.mxu0 %v2174
        %2315 = vmatpush.bf16.msra.mxu0 %v2168
        %2316 = vmatpush.bf16.msra.mxu0 %v2162
        %2317 = vmatpush.bf16.msra.mxu0 %v2156
        %2318 = vmatpush.bf16.msra.mxu0 %v2150
        %2319 = vmatpush.bf16.msra.mxu0 %v2144
        %2320 = vmatpush.bf16.msra.mxu0 %v2138
        %2321 = vmatpush.bf16.msra.mxu0 %v2132
        %2322 = vmatmul.bf16.gmra.mxu0 %v1792
        %v2323 = vpop.f32.mrf.mxu0
        %v2324 = vadd.f32 %v2311, %v2323
        %v2325 = vpop.f32.mrf.mxu0
        %2326 = vdwg.mxu0
        %2327 = vmatpush.bf16.msra.mxu0 %v2127
        %2328 = vmatpush.bf16.msra.mxu0 %v2121
        %2329 = vmatpush.bf16.msra.mxu0 %v2115
        %2330 = vmatpush.bf16.msra.mxu0 %v2109
        %2331 = vmatpush.bf16.msra.mxu0 %v2103
        %2332 = vmatpush.bf16.msra.mxu0 %v2097
        %2333 = vmatpush.bf16.msra.mxu0 %v2091
        %2334 = vmatpush.bf16.msra.mxu0 %v2085
        %2335 = vmatmul.bf16.gmra.mxu0 %v1791
        %v2336 = vpop.f32.mrf.mxu0
        %v2337 = vadd.f32 0.0, %v2336
        %v2338 = vpop.f32.mrf.mxu0
        %2339 = vdwg.mxu0
        %2340 = vmatpush.bf16.msra.mxu0 %v2175
        %2341 = vmatpush.bf16.msra.mxu0 %v2169
        %2342 = vmatpush.bf16.msra.mxu0 %v2163
        %2343 = vmatpush.bf16.msra.mxu0 %v2157
        %2344 = vmatpush.bf16.msra.mxu0 %v2151
        %2345 = vmatpush.bf16.msra.mxu0 %v2145
        %2346 = vmatpush.bf16.msra.mxu0 %v2139
        %2347 = vmatpush.bf16.msra.mxu0 %v2133
        %2348 = vmatmul.bf16.gmra.mxu0 %v1792
        %v2349 = vpop.f32.mrf.mxu0
        %v2350 = vadd.f32 %v2337, %v2349
        %v2351 = vpop.f32.mrf.mxu0
        %2352 = vdwg.mxu0
        %2353 = vmatpush.bf16.msra.mxu0 %v2128
        %2354 = vmatpush.bf16.msra.mxu0 %v2122
        %2355 = vmatpush.bf16.msra.mxu0 %v2116
        %2356 = vmatpush.bf16.msra.mxu0 %v2110
        %2357 = vmatpush.bf16.msra.mxu0 %v2104
        %2358 = vmatpush.bf16.msra.mxu0 %v2098
        %2359 = vmatpush.bf16.msra.mxu0 %v2092
        %2360 = vmatpush.bf16.msra.mxu0 %v2086
        %2361 = vmatmul.bf16.gmra.mxu0 %v1791
        %v2362 = vpop.f32.mrf.mxu0
        %v2363 = vadd.f32 0.0, %v2362
        %v2364 = vpop.f32.mrf.mxu0
        %2365 = vdwg.mxu0
        %2366 = vmatpush.bf16.msra.mxu0 %v2176
        %2367 = vmatpush.bf16.msra.mxu0 %v2170
        %2368 = vmatpush.bf16.msra.mxu0 %v2164
        %2369 = vmatpush.bf16.msra.mxu0 %v2158
        %2370 = vmatpush.bf16.msra.mxu0 %v2152
        %2371 = vmatpush.bf16.msra.mxu0 %v2146
        %2372 = vmatpush.bf16.msra.mxu0 %v2140
        %2373 = vmatpush.bf16.msra.mxu0 %v2134
        %2374 = vmatmul.bf16.gmra.mxu0 %v1792
        %v2375 = vpop.f32.mrf.mxu0
        %v2376 = vadd.f32 %v2363, %v2375
        %v2377 = vpop.f32.mrf.mxu0
        %2378 = vdwg.mxu0
        %2379 = vmatpush.bf16.msra.mxu0 %v2129
        %2380 = vmatpush.bf16.msra.mxu0 %v2123
        %2381 = vmatpush.bf16.msra.mxu0 %v2117
        %2382 = vmatpush.bf16.msra.mxu0 %v2111
        %2383 = vmatpush.bf16.msra.mxu0 %v2105
        %2384 = vmatpush.bf16.msra.mxu0 %v2099
        %2385 = vmatpush.bf16.msra.mxu0 %v2093
        %2386 = vmatpush.bf16.msra.mxu0 %v2087
        %2387 = vmatmul.bf16.gmra.mxu0 %v1791
        %v2388 = vpop.f32.mrf.mxu0
        %v2389 = vadd.f32 0.0, %v2388
        %v2390 = vpop.f32.mrf.mxu0
        %2391 = vdwg.mxu0
        %2392 = vmatpush.bf16.msra.mxu0 %v2177
        %2393 = vmatpush.bf16.msra.mxu0 %v2171
        %2394 = vmatpush.bf16.msra.mxu0 %v2165
        %2395 = vmatpush.bf16.msra.mxu0 %v2159
        %2396 = vmatpush.bf16.msra.mxu0 %v2153
        %2397 = vmatpush.bf16.msra.mxu0 %v2147
        %2398 = vmatpush.bf16.msra.mxu0 %v2141
        %2399 = vmatpush.bf16.msra.mxu0 %v2135
        %2400 = vmatmul.bf16.gmra.mxu0 %v1792
        %v2401 = vpop.f32.mrf.mxu0
        %v2402 = vadd.f32 %v2389, %v2401
        %v2403 = vpop.f32.mrf.mxu0
        %2404 = vdwg.mxu0
        %2405 = vmatpush.bf16.msra.mxu0 %v2130
        %2406 = vmatpush.bf16.msra.mxu0 %v2124
        %2407 = vmatpush.bf16.msra.mxu0 %v2118
        %2408 = vmatpush.bf16.msra.mxu0 %v2112
        %2409 = vmatpush.bf16.msra.mxu0 %v2106
        %2410 = vmatpush.bf16.msra.mxu0 %v2100
        %2411 = vmatpush.bf16.msra.mxu0 %v2094
        %2412 = vmatpush.bf16.msra.mxu0 %v2088
        %2413 = vmatmul.bf16.gmra.mxu0 %v1791
        %v2414 = vpop.f32.mrf.mxu0
        %v2415 = vadd.f32 0.0, %v2414
        %v2416 = vpop.f32.mrf.mxu0
        %2417 = vdwg.mxu0
        %2418 = vmatpush.bf16.msra.mxu0 %v2178
        %2419 = vmatpush.bf16.msra.mxu0 %v2172
        %2420 = vmatpush.bf16.msra.mxu0 %v2166
        %2421 = vmatpush.bf16.msra.mxu0 %v2160
        %2422 = vmatpush.bf16.msra.mxu0 %v2154
        %2423 = vmatpush.bf16.msra.mxu0 %v2148
        %2424 = vmatpush.bf16.msra.mxu0 %v2142
        %2425 = vmatpush.bf16.msra.mxu0 %v2136
        %2426 = vmatmul.bf16.gmra.mxu0 %v1792
        %v2427 = vpop.f32.mrf.mxu0
        %v2428 = vadd.f32 %v2415, %v2427
        %v2429 = vpop.f32.mrf.mxu0
        %2430 = vdwg.mxu0
        %v2431 = vadd.f32 %v1559, %v2298
        %v2432 = vadd.f32 %v1585, %v2324
        %v2433 = vadd.f32 %v1611, %v2350
        %v2434 = vadd.f32 %v1637, %v2376
        %v2435 = vadd.f32 %v1663, %v2402
        %v2436 = vadd.f32 %v1689, %v2428
        %s2437 = scalar_lea.vmem [#allocation2], 2304
        %v2438 = vld [vmem:[%s2437] sm:$0xff]
        %v2439 = vld [vmem:[%s2437 + $0x8] sm:$0xff]
        %v2440 = vld [vmem:[%s2437 + $0x10] sm:$0xff]
        %v2441 = vld [vmem:[%s2437 + $0x18] sm:$0xff]
        %v2442 = vld [vmem:[%s2437 + $0x20] sm:$0xff]
        %v2443 = vld [vmem:[%s2437 + $0x28] sm:$0xff]
        %v2444 = vld [vmem:[%s2437 + $0x30] sm:$0xff]
        %v2445 = vld [vmem:[%s2437 + $0x38] sm:$0xff]
        %v2446 = vld [vmem:[%s2437 + $0x40] sm:$0xff]
        %v2447 = vld [vmem:[%s2437 + $0x48] sm:$0xff]
        %v2448 = vld [vmem:[%s2437 + $0x50] sm:$0xff]
        %v2449 = vld [vmem:[%s2437 + $0x58] sm:$0xff]
        %v2450 = vld [vmem:[%s2437 + $0x60] sm:$0xff]
        %v2451 = vld [vmem:[%s2437 + $0x68] sm:$0xff]
        %v2452 = vld [vmem:[%s2437 + $0x70] sm:$0xff]
        %v2453 = vld [vmem:[%s2437 + $0x78] sm:$0xff]
        %v2454 = vld [vmem:[%s2437 + $0x80] sm:$0xff]
        %v2455 = vld [vmem:[%s2437 + $0x88] sm:$0xff]
        %v2456 = vld [vmem:[%s2437 + $0x90] sm:$0xff]
        %v2457 = vld [vmem:[%s2437 + $0x98] sm:$0xff]
        %v2458 = vld [vmem:[%s2437 + $0xa0] sm:$0xff]
        %v2459 = vld [vmem:[%s2437 + $0xa8] sm:$0xff]
        %v2460 = vld [vmem:[%s2437 + $0xb0] sm:$0xff]
        %v2461 = vld [vmem:[%s2437 + $0xb8] sm:$0xff]
        %v2462 = vld [vmem:[%s2437 + $0xc0] sm:$0xff]
        %v2463 = vld [vmem:[%s2437 + $0xc8] sm:$0xff]
        %v2464 = vld [vmem:[%s2437 + $0xd0] sm:$0xff]
        %v2465 = vld [vmem:[%s2437 + $0xd8] sm:$0xff]
        %v2466 = vld [vmem:[%s2437 + $0xe0] sm:$0xff]
        %v2467 = vld [vmem:[%s2437 + $0xe8] sm:$0xff]
        %v2468 = vld [vmem:[%s2437 + $0xf0] sm:$0xff]
        %v2469 = vld [vmem:[%s2437 + $0xf8] sm:$0xff]
        %v2470 = vld [vmem:[%s2437 + $0x100] sm:$0xff]
        %v2471 = vld [vmem:[%s2437 + $0x108] sm:$0xff]
        %v2472 = vld [vmem:[%s2437 + $0x110] sm:$0xff]
        %v2473 = vld [vmem:[%s2437 + $0x118] sm:$0xff]
        %v2474 = vld [vmem:[%s2437 + $0x120] sm:$0xff]
        %v2475 = vld [vmem:[%s2437 + $0x128] sm:$0xff]
        %v2476 = vld [vmem:[%s2437 + $0x130] sm:$0xff]
        %v2477 = vld [vmem:[%s2437 + $0x138] sm:$0xff]
        %v2478 = vld [vmem:[%s2437 + $0x140] sm:$0xff]
        %v2479 = vld [vmem:[%s2437 + $0x148] sm:$0xff]
        %v2480 = vld [vmem:[%s2437 + $0x150] sm:$0xff]
        %v2481 = vld [vmem:[%s2437 + $0x158] sm:$0xff]
        %v2482 = vld [vmem:[%s2437 + $0x160] sm:$0xff]
        %v2483 = vld [vmem:[%s2437 + $0x168] sm:$0xff]
        %v2484 = vld [vmem:[%s2437 + $0x170] sm:$0xff]
        %v2485 = vld [vmem:[%s2437 + $0x178] sm:$0xff]
        %v2486 = vld [vmem:[%s2437 + $0x180] sm:$0xff]
        %v2487 = vld [vmem:[%s2437 + $0x188] sm:$0xff]
        %v2488 = vld [vmem:[%s2437 + $0x190] sm:$0xff]
        %v2489 = vld [vmem:[%s2437 + $0x198] sm:$0xff]
        %v2490 = vld [vmem:[%s2437 + $0x1a0] sm:$0xff]
        %v2491 = vld [vmem:[%s2437 + $0x1a8] sm:$0xff]
        %v2492 = vld [vmem:[%s2437 + $0x1b0] sm:$0xff]
        %v2493 = vld [vmem:[%s2437 + $0x1b8] sm:$0xff]
        %v2494 = vld [vmem:[%s2437 + $0x1c0] sm:$0xff]
        %v2495 = vld [vmem:[%s2437 + $0x1c8] sm:$0xff]
        %v2496 = vld [vmem:[%s2437 + $0x1d0] sm:$0xff]
        %v2497 = vld [vmem:[%s2437 + $0x1d8] sm:$0xff]
        %v2498 = vld [vmem:[%s2437 + $0x1e0] sm:$0xff]
        %v2499 = vld [vmem:[%s2437 + $0x1e8] sm:$0xff]
        %v2500 = vld [vmem:[%s2437 + $0x1f0] sm:$0xff]
        %v2501 = vld [vmem:[%s2437 + $0x1f8] sm:$0xff]
        %v2502 = vld [vmem:[%s2437 + $0x200] sm:$0xff]
        %v2503 = vld [vmem:[%s2437 + $0x208] sm:$0xff]
        %v2504 = vld [vmem:[%s2437 + $0x210] sm:$0xff]
        %v2505 = vld [vmem:[%s2437 + $0x218] sm:$0xff]
        %v2506 = vld [vmem:[%s2437 + $0x220] sm:$0xff]
        %v2507 = vld [vmem:[%s2437 + $0x228] sm:$0xff]
        %v2508 = vld [vmem:[%s2437 + $0x230] sm:$0xff]
        %v2509 = vld [vmem:[%s2437 + $0x238] sm:$0xff]
        %v2510 = vld [vmem:[%s2437 + $0x240] sm:$0xff]
        %v2511 = vld [vmem:[%s2437 + $0x248] sm:$0xff]
        %v2512 = vld [vmem:[%s2437 + $0x250] sm:$0xff]
        %v2513 = vld [vmem:[%s2437 + $0x258] sm:$0xff]
        %v2514 = vld [vmem:[%s2437 + $0x260] sm:$0xff]
        %v2515 = vld [vmem:[%s2437 + $0x268] sm:$0xff]
        %v2516 = vld [vmem:[%s2437 + $0x270] sm:$0xff]
        %v2517 = vld [vmem:[%s2437 + $0x278] sm:$0xff]
        %v2518 = vld [vmem:[%s2437 + $0x280] sm:$0xff]
        %v2519 = vld [vmem:[%s2437 + $0x288] sm:$0xff]
        %v2520 = vld [vmem:[%s2437 + $0x290] sm:$0xff]
        %v2521 = vld [vmem:[%s2437 + $0x298] sm:$0xff]
        %v2522 = vld [vmem:[%s2437 + $0x2a0] sm:$0xff]
        %v2523 = vld [vmem:[%s2437 + $0x2a8] sm:$0xff]
        %v2524 = vld [vmem:[%s2437 + $0x2b0] sm:$0xff]
        %v2525 = vld [vmem:[%s2437 + $0x2b8] sm:$0xff]
        %v2526 = vld [vmem:[%s2437 + $0x2c0] sm:$0xff]
        %v2527 = vld [vmem:[%s2437 + $0x2c8] sm:$0xff]
        %v2528 = vld [vmem:[%s2437 + $0x2d0] sm:$0xff]
        %v2529 = vld [vmem:[%s2437 + $0x2d8] sm:$0xff]
        %v2530 = vld [vmem:[%s2437 + $0x2e0] sm:$0xff]
        %v2531 = vld [vmem:[%s2437 + $0x2e8] sm:$0xff]
        %v2532 = vld [vmem:[%s2437 + $0x2f0] sm:$0xff]
        %v2533 = vld [vmem:[%s2437 + $0x2f8] sm:$0xff]
        %v2534 = vrot.slane %v405, 1
        %v2535 = vrot.slane %v407, 2
        %v2536 = vor.u32 %v2534, %v2535
        %v2537 = vrot.slane %v412, 1
        %v2538 = vrot.slane %v414, 2
        %v2539 = vor.u32 %v2537, %v2538
        %v2638 = vunpack.c.l.b16 %v2438
        %v2639 = vunpack.c.h.b16 %v2438
        %v2640 = vunpack.c.l.b16 %v2439
        %v2641 = vunpack.c.h.b16 %v2439
        %v2642 = vunpack.c.l.b16 %v2440
        %v2643 = vunpack.c.h.b16 %v2440
        %v2644 = vunpack.c.l.b16 %v2441
        %v2645 = vunpack.c.h.b16 %v2441
        %v2646 = vunpack.c.l.b16 %v2442
        %v2647 = vunpack.c.h.b16 %v2442
        %v2648 = vunpack.c.l.b16 %v2443
        %v2649 = vunpack.c.h.b16 %v2443
        %v2650 = vunpack.c.l.b16 %v2444
        %v2651 = vunpack.c.h.b16 %v2444
        %v2652 = vunpack.c.l.b16 %v2445
        %v2653 = vunpack.c.h.b16 %v2445
        %v2654 = vunpack.c.l.b16 %v2446
        %v2655 = vunpack.c.h.b16 %v2446
        %v2656 = vunpack.c.l.b16 %v2447
        %v2657 = vunpack.c.h.b16 %v2447
        %v2658 = vunpack.c.l.b16 %v2448
        %v2659 = vunpack.c.h.b16 %v2448
        %v2660 = vunpack.c.l.b16 %v2449
        %v2661 = vunpack.c.h.b16 %v2449
        %v2662 = vunpack.c.l.b16 %v2450
        %v2663 = vunpack.c.h.b16 %v2450
        %v2664 = vunpack.c.l.b16 %v2451
        %v2665 = vunpack.c.h.b16 %v2451
        %v2666 = vunpack.c.l.b16 %v2452
        %v2667 = vunpack.c.h.b16 %v2452
        %v2668 = vunpack.c.l.b16 %v2453
        %v2669 = vunpack.c.h.b16 %v2453
        %v2670 = vunpack.c.l.b16 %v2454
        %v2671 = vunpack.c.h.b16 %v2454
        %v2672 = vunpack.c.l.b16 %v2455
        %v2673 = vunpack.c.h.b16 %v2455
        %v2674 = vunpack.c.l.b16 %v2456
        %v2675 = vunpack.c.h.b16 %v2456
        %v2676 = vunpack.c.l.b16 %v2457
        %v2677 = vunpack.c.h.b16 %v2457
        %v2678 = vunpack.c.l.b16 %v2458
        %v2679 = vunpack.c.h.b16 %v2458
        %v2680 = vunpack.c.l.b16 %v2459
        %v2681 = vunpack.c.h.b16 %v2459
        %v2682 = vunpack.c.l.b16 %v2460
        %v2683 = vunpack.c.h.b16 %v2460
        %v2684 = vunpack.c.l.b16 %v2461
        %v2685 = vunpack.c.h.b16 %v2461
        %v2686 = vunpack.c.l.b16 %v2462
        %v2687 = vunpack.c.h.b16 %v2462
        %v2688 = vunpack.c.l.b16 %v2463
        %v2689 = vunpack.c.h.b16 %v2463
        %v2690 = vunpack.c.l.b16 %v2464
        %v2691 = vunpack.c.h.b16 %v2464
        %v2692 = vunpack.c.l.b16 %v2465
        %v2693 = vunpack.c.h.b16 %v2465
        %v2694 = vunpack.c.l.b16 %v2466
        %v2695 = vunpack.c.h.b16 %v2466
        %v2696 = vunpack.c.l.b16 %v2467
        %v2697 = vunpack.c.h.b16 %v2467
        %v2698 = vunpack.c.l.b16 %v2468
        %v2699 = vunpack.c.h.b16 %v2468
        %v2700 = vunpack.c.l.b16 %v2469
        %v2701 = vunpack.c.h.b16 %v2469
        %v2702 = vunpack.c.l.b16 %v2470
        %v2703 = vunpack.c.h.b16 %v2470
        %v2704 = vunpack.c.l.b16 %v2471
        %v2705 = vunpack.c.h.b16 %v2471
        %v2706 = vunpack.c.l.b16 %v2472
        %v2707 = vunpack.c.h.b16 %v2472
        %v2708 = vunpack.c.l.b16 %v2473
        %v2709 = vunpack.c.h.b16 %v2473
        %v2710 = vunpack.c.l.b16 %v2474
        %v2711 = vunpack.c.h.b16 %v2474
        %v2712 = vunpack.c.l.b16 %v2475
        %v2713 = vunpack.c.h.b16 %v2475
        %v2714 = vunpack.c.l.b16 %v2476
        %v2715 = vunpack.c.h.b16 %v2476
        %v2716 = vunpack.c.l.b16 %v2477
        %v2717 = vunpack.c.h.b16 %v2477
        %v2718 = vunpack.c.l.b16 %v2478
        %v2719 = vunpack.c.h.b16 %v2478
        %v2720 = vunpack.c.l.b16 %v2479
        %v2721 = vunpack.c.h.b16 %v2479
        %v2722 = vunpack.c.l.b16 %v2480
        %v2723 = vunpack.c.h.b16 %v2480
        %v2724 = vunpack.c.l.b16 %v2481
        %v2725 = vunpack.c.h.b16 %v2481
        %v2726 = vunpack.c.l.b16 %v2482
        %v2727 = vunpack.c.h.b16 %v2482
        %v2728 = vunpack.c.l.b16 %v2483
        %v2729 = vunpack.c.h.b16 %v2483
        %v2730 = vunpack.c.l.b16 %v2484
        %v2731 = vunpack.c.h.b16 %v2484
        %v2732 = vunpack.c.l.b16 %v2485
        %v2733 = vunpack.c.h.b16 %v2485
        %v2734 = vunpack.c.l.b16 %v2486
        %v2735 = vunpack.c.h.b16 %v2486
        %v2736 = vunpack.c.l.b16 %v2487
        %v2737 = vunpack.c.h.b16 %v2487
        %v2738 = vunpack.c.l.b16 %v2488
        %v2739 = vunpack.c.h.b16 %v2488
        %v2740 = vunpack.c.l.b16 %v2489
        %v2741 = vunpack.c.h.b16 %v2489
        %v2742 = vunpack.c.l.b16 %v2490
        %v2743 = vunpack.c.h.b16 %v2490
        %v2744 = vunpack.c.l.b16 %v2491
        %v2745 = vunpack.c.h.b16 %v2491
        %v2746 = vunpack.c.l.b16 %v2492
        %v2747 = vunpack.c.h.b16 %v2492
        %v2748 = vunpack.c.l.b16 %v2493
        %v2749 = vunpack.c.h.b16 %v2493
        %v2750 = vunpack.c.l.b16 %v2494
        %v2751 = vunpack.c.h.b16 %v2494
        %v2752 = vunpack.c.l.b16 %v2495
        %v2753 = vunpack.c.h.b16 %v2495
        %v2754 = vunpack.c.l.b16 %v2496
        %v2755 = vunpack.c.h.b16 %v2496
        %v2756 = vunpack.c.l.b16 %v2497
        %v2757 = vunpack.c.h.b16 %v2497
        %v2758 = vunpack.c.l.b16 %v2498
        %v2759 = vunpack.c.h.b16 %v2498
        %v2760 = vunpack.c.l.b16 %v2499
        %v2761 = vunpack.c.h.b16 %v2499
        %v2762 = vunpack.c.l.b16 %v2500
        %v2763 = vunpack.c.h.b16 %v2500
        %v2764 = vunpack.c.l.b16 %v2501
        %v2765 = vunpack.c.h.b16 %v2501
        %v2766 = vunpack.c.l.b16 %v2502
        %v2767 = vunpack.c.h.b16 %v2502
        %v2768 = vunpack.c.l.b16 %v2503
        %v2769 = vunpack.c.h.b16 %v2503
        %v2770 = vunpack.c.l.b16 %v2504
        %v2771 = vunpack.c.h.b16 %v2504
        %v2772 = vunpack.c.l.b16 %v2505
        %v2773 = vunpack.c.h.b16 %v2505
        %v2774 = vunpack.c.l.b16 %v2506
        %v2775 = vunpack.c.h.b16 %v2506
        %v2776 = vunpack.c.l.b16 %v2507
        %v2777 = vunpack.c.h.b16 %v2507
        %v2778 = vunpack.c.l.b16 %v2508
        %v2779 = vunpack.c.h.b16 %v2508
        %v2780 = vunpack.c.l.b16 %v2509
        %v2781 = vunpack.c.h.b16 %v2509
        %v2782 = vunpack.c.l.b16 %v2510
        %v2783 = vunpack.c.h.b16 %v2510
        %v2784 = vunpack.c.l.b16 %v2511
        %v2785 = vunpack.c.h.b16 %v2511
        %v2786 = vunpack.c.l.b16 %v2512
        %v2787 = vunpack.c.h.b16 %v2512
        %v2788 = vunpack.c.l.b16 %v2513
        %v2789 = vunpack.c.h.b16 %v2513
        %v2790 = vunpack.c.l.b16 %v2514
        %v2791 = vunpack.c.h.b16 %v2514
        %v2792 = vunpack.c.l.b16 %v2515
        %v2793 = vunpack.c.h.b16 %v2515
        %v2794 = vunpack.c.l.b16 %v2516
        %v2795 = vunpack.c.h.b16 %v2516
        %v2796 = vunpack.c.l.b16 %v2517
        %v2797 = vunpack.c.h.b16 %v2517
        %v2798 = vunpack.c.l.b16 %v2518
        %v2799 = vunpack.c.h.b16 %v2518
        %v2800 = vunpack.c.l.b16 %v2519
        %v2801 = vunpack.c.h.b16 %v2519
        %v2802 = vunpack.c.l.b16 %v2520
        %v2803 = vunpack.c.h.b16 %v2520
        %v2804 = vunpack.c.l.b16 %v2521
        %v2805 = vunpack.c.h.b16 %v2521
        %v2806 = vunpack.c.l.b16 %v2522
        %v2807 = vunpack.c.h.b16 %v2522
        %v2808 = vunpack.c.l.b16 %v2523
        %v2809 = vunpack.c.h.b16 %v2523
        %v2810 = vunpack.c.l.b16 %v2524
        %v2811 = vunpack.c.h.b16 %v2524
        %v2812 = vunpack.c.l.b16 %v2525
        %v2813 = vunpack.c.h.b16 %v2525
        %v2814 = vunpack.c.l.b16 %v2526
        %v2815 = vunpack.c.h.b16 %v2526
        %v2816 = vunpack.c.l.b16 %v2527
        %v2817 = vunpack.c.h.b16 %v2527
        %v2818 = vunpack.c.l.b16 %v2528
        %v2819 = vunpack.c.h.b16 %v2528
        %v2820 = vunpack.c.l.b16 %v2529
        %v2821 = vunpack.c.h.b16 %v2529
        %v2822 = vunpack.c.l.b16 %v2530
        %v2823 = vunpack.c.h.b16 %v2530
        %v2824 = vunpack.c.l.b16 %v2531
        %v2825 = vunpack.c.h.b16 %v2531
        %v2826 = vunpack.c.l.b16 %v2532
        %v2827 = vunpack.c.h.b16 %v2532
        %v2828 = vunpack.c.l.b16 %v2533
        %v2829 = vunpack.c.h.b16 %v2533
        %v2830 = vpack.c.b16 %v2644, %v2638
        %v2831 = vpack.c.b16 %v2645, %v2639
        %v2832 = vpack.c.b16 %v2646, %v2640
        %v2833 = vpack.c.b16 %v2647, %v2641
        %v2834 = vpack.c.b16 %v2648, %v2642
        %v2835 = vpack.c.b16 %v2649, %v2643
        %v2836 = vpack.c.b16 %v2656, %v2650
        %v2837 = vpack.c.b16 %v2657, %v2651
        %v2838 = vpack.c.b16 %v2658, %v2652
        %v2839 = vpack.c.b16 %v2659, %v2653
        %v2840 = vpack.c.b16 %v2660, %v2654
        %v2841 = vpack.c.b16 %v2661, %v2655
        %v2842 = vpack.c.b16 %v2668, %v2662
        %v2843 = vpack.c.b16 %v2669, %v2663
        %v2844 = vpack.c.b16 %v2670, %v2664
        %v2845 = vpack.c.b16 %v2671, %v2665
        %v2846 = vpack.c.b16 %v2672, %v2666
        %v2847 = vpack.c.b16 %v2673, %v2667
        %v2848 = vpack.c.b16 %v2680, %v2674
        %v2849 = vpack.c.b16 %v2681, %v2675
        %v2850 = vpack.c.b16 %v2682, %v2676
        %v2851 = vpack.c.b16 %v2683, %v2677
        %v2852 = vpack.c.b16 %v2684, %v2678
        %v2853 = vpack.c.b16 %v2685, %v2679
        %v2854 = vpack.c.b16 %v2692, %v2686
        %v2855 = vpack.c.b16 %v2693, %v2687
        %v2856 = vpack.c.b16 %v2694, %v2688
        %v2857 = vpack.c.b16 %v2695, %v2689
        %v2858 = vpack.c.b16 %v2696, %v2690
        %v2859 = vpack.c.b16 %v2697, %v2691
        %v2860 = vpack.c.b16 %v2704, %v2698
        %v2861 = vpack.c.b16 %v2705, %v2699
        %v2862 = vpack.c.b16 %v2706, %v2700
        %v2863 = vpack.c.b16 %v2707, %v2701
        %v2864 = vpack.c.b16 %v2708, %v2702
        %v2865 = vpack.c.b16 %v2709, %v2703
        %v2866 = vpack.c.b16 %v2716, %v2710
        %v2867 = vpack.c.b16 %v2717, %v2711
        %v2868 = vpack.c.b16 %v2718, %v2712
        %v2869 = vpack.c.b16 %v2719, %v2713
        %v2870 = vpack.c.b16 %v2720, %v2714
        %v2871 = vpack.c.b16 %v2721, %v2715
        %v2872 = vpack.c.b16 %v2728, %v2722
        %v2873 = vpack.c.b16 %v2729, %v2723
        %v2874 = vpack.c.b16 %v2730, %v2724
        %v2875 = vpack.c.b16 %v2731, %v2725
        %v2876 = vpack.c.b16 %v2732, %v2726
        %v2877 = vpack.c.b16 %v2733, %v2727
        %v2878 = vpack.c.b16 %v2740, %v2734
        %v2879 = vpack.c.b16 %v2741, %v2735
        %v2880 = vpack.c.b16 %v2742, %v2736
        %v2881 = vpack.c.b16 %v2743, %v2737
        %v2882 = vpack.c.b16 %v2744, %v2738
        %v2883 = vpack.c.b16 %v2745, %v2739
        %v2884 = vpack.c.b16 %v2752, %v2746
        %v2885 = vpack.c.b16 %v2753, %v2747
        %v2886 = vpack.c.b16 %v2754, %v2748
        %v2887 = vpack.c.b16 %v2755, %v2749
        %v2888 = vpack.c.b16 %v2756, %v2750
        %v2889 = vpack.c.b16 %v2757, %v2751
        %v2890 = vpack.c.b16 %v2764, %v2758
        %v2891 = vpack.c.b16 %v2765, %v2759
        %v2892 = vpack.c.b16 %v2766, %v2760
        %v2893 = vpack.c.b16 %v2767, %v2761
        %v2894 = vpack.c.b16 %v2768, %v2762
        %v2895 = vpack.c.b16 %v2769, %v2763
        %v2896 = vpack.c.b16 %v2776, %v2770
        %v2897 = vpack.c.b16 %v2777, %v2771
        %v2898 = vpack.c.b16 %v2778, %v2772
        %v2899 = vpack.c.b16 %v2779, %v2773
        %v2900 = vpack.c.b16 %v2780, %v2774
        %v2901 = vpack.c.b16 %v2781, %v2775
        %v2902 = vpack.c.b16 %v2788, %v2782
        %v2903 = vpack.c.b16 %v2789, %v2783
        %v2904 = vpack.c.b16 %v2790, %v2784
        %v2905 = vpack.c.b16 %v2791, %v2785
        %v2906 = vpack.c.b16 %v2792, %v2786
        %v2907 = vpack.c.b16 %v2793, %v2787
        %v2908 = vpack.c.b16 %v2800, %v2794
        %v2909 = vpack.c.b16 %v2801, %v2795
        %v2910 = vpack.c.b16 %v2802, %v2796
        %v2911 = vpack.c.b16 %v2803, %v2797
        %v2912 = vpack.c.b16 %v2804, %v2798
        %v2913 = vpack.c.b16 %v2805, %v2799
        %v2914 = vpack.c.b16 %v2812, %v2806
        %v2915 = vpack.c.b16 %v2813, %v2807
        %v2916 = vpack.c.b16 %v2814, %v2808
        %v2917 = vpack.c.b16 %v2815, %v2809
        %v2918 = vpack.c.b16 %v2816, %v2810
        %v2919 = vpack.c.b16 %v2817, %v2811
        %v2920 = vpack.c.b16 %v2824, %v2818
        %v2921 = vpack.c.b16 %v2825, %v2819
        %v2922 = vpack.c.b16 %v2826, %v2820
        %v2923 = vpack.c.b16 %v2827, %v2821
        %v2924 = vpack.c.b16 %v2828, %v2822
        %v2925 = vpack.c.b16 %v2829, %v2823
        %3022 = vmatpush.bf16.msra.mxu0 %v2872
        %3023 = vmatpush.bf16.msra.mxu0 %v2866
        %3024 = vmatpush.bf16.msra.mxu0 %v2860
        %3025 = vmatpush.bf16.msra.mxu0 %v2854
        %3026 = vmatpush.bf16.msra.mxu0 %v2848
        %3027 = vmatpush.bf16.msra.mxu0 %v2842
        %3028 = vmatpush.bf16.msra.mxu0 %v2836
        %3029 = vmatpush.bf16.msra.mxu0 %v2830
        %3030 = vmatmul.bf16.gmra.mxu0 %v2536
        %v3031 = vpop.f32.mrf.mxu0
        %v3032 = vadd.f32 0.0, %v3031
        %v3033 = vpop.f32.mrf.mxu0
        %3034 = vdwg.mxu0
        %3035 = vmatpush.bf16.msra.mxu0 %v2920
        %3036 = vmatpush.bf16.msra.mxu0 %v2914
        %3037 = vmatpush.bf16.msra.mxu0 %v2908
        %3038 = vmatpush.bf16.msra.mxu0 %v2902
        %3039 = vmatpush.bf16.msra.mxu0 %v2896
        %3040 = vmatpush.bf16.msra.mxu0 %v2890
        %3041 = vmatpush.bf16.msra.mxu0 %v2884
        %3042 = vmatpush.bf16.msra.mxu0 %v2878
        %3043 = vmatmul.bf16.gmra.mxu0 %v2539
        %v3044 = vpop.f32.mrf.mxu0
        %v3045 = vadd.f32 %v3032, %v3044
        %v3046 = vpop.f32.mrf.mxu0
        %3047 = vdwg.mxu0
        %3048 = vmatpush.bf16.msra.mxu0 %v2873
        %3049 = vmatpush.bf16.msra.mxu0 %v2867
        %3050 = vmatpush.bf16.msra.mxu0 %v2861
        %3051 = vmatpush.bf16.msra.mxu0 %v2855
        %3052 = vmatpush.bf16.msra.mxu0 %v2849
        %3053 = vmatpush.bf16.msra.mxu0 %v2843
        %3054 = vmatpush.bf16.msra.mxu0 %v2837
        %3055 = vmatpush.bf16.msra.mxu0 %v2831
        %3056 = vmatmul.bf16.gmra.mxu0 %v2536
        %v3057 = vpop.f32.mrf.mxu0
        %v3058 = vadd.f32 0.0, %v3057
        %v3059 = vpop.f32.mrf.mxu0
        %3060 = vdwg.mxu0
        %3061 = vmatpush.bf16.msra.mxu0 %v2921
        %3062 = vmatpush.bf16.msra.mxu0 %v2915
        %3063 = vmatpush.bf16.msra.mxu0 %v2909
        %3064 = vmatpush.bf16.msra.mxu0 %v2903
        %3065 = vmatpush.bf16.msra.mxu0 %v2897
        %3066 = vmatpush.bf16.msra.mxu0 %v2891
        %3067 = vmatpush.bf16.msra.mxu0 %v2885
        %3068 = vmatpush.bf16.msra.mxu0 %v2879
        %3069 = vmatmul.bf16.gmra.mxu0 %v2539
        %v3070 = vpop.f32.mrf.mxu0
        %v3071 = vadd.f32 %v3058, %v3070
        %v3072 = vpop.f32.mrf.mxu0
        %3073 = vdwg.mxu0
        %3074 = vmatpush.bf16.msra.mxu0 %v2874
        %3075 = vmatpush.bf16.msra.mxu0 %v2868
        %3076 = vmatpush.bf16.msra.mxu0 %v2862
        %3077 = vmatpush.bf16.msra.mxu0 %v2856
        %3078 = vmatpush.bf16.msra.mxu0 %v2850
        %3079 = vmatpush.bf16.msra.mxu0 %v2844
        %3080 = vmatpush.bf16.msra.mxu0 %v2838
        %3081 = vmatpush.bf16.msra.mxu0 %v2832
        %3082 = vmatmul.bf16.gmra.mxu0 %v2536
        %v3083 = vpop.f32.mrf.mxu0
        %v3084 = vadd.f32 0.0, %v3083
        %v3085 = vpop.f32.mrf.mxu0
        %3086 = vdwg.mxu0
        %3087 = vmatpush.bf16.msra.mxu0 %v2922
        %3088 = vmatpush.bf16.msra.mxu0 %v2916
        %3089 = vmatpush.bf16.msra.mxu0 %v2910
        %3090 = vmatpush.bf16.msra.mxu0 %v2904
        %3091 = vmatpush.bf16.msra.mxu0 %v2898
        %3092 = vmatpush.bf16.msra.mxu0 %v2892
        %3093 = vmatpush.bf16.msra.mxu0 %v2886
        %3094 = vmatpush.bf16.msra.mxu0 %v2880
        %3095 = vmatmul.bf16.gmra.mxu0 %v2539
        %v3096 = vpop.f32.mrf.mxu0
        %v3097 = vadd.f32 %v3084, %v3096
        %v3098 = vpop.f32.mrf.mxu0
        %3099 = vdwg.mxu0
        %3100 = vmatpush.bf16.msra.mxu0 %v2875
        %3101 = vmatpush.bf16.msra.mxu0 %v2869
        %3102 = vmatpush.bf16.msra.mxu0 %v2863
        %3103 = vmatpush.bf16.msra.mxu0 %v2857
        %3104 = vmatpush.bf16.msra.mxu0 %v2851
        %3105 = vmatpush.bf16.msra.mxu0 %v2845
        %3106 = vmatpush.bf16.msra.mxu0 %v2839
        %3107 = vmatpush.bf16.msra.mxu0 %v2833
        %3108 = vmatmul.bf16.gmra.mxu0 %v2536
        %v3109 = vpop.f32.mrf.mxu0
        %v3110 = vadd.f32 0.0, %v3109
        %v3111 = vpop.f32.mrf.mxu0
        %3112 = vdwg.mxu0
        %3113 = vmatpush.bf16.msra.mxu0 %v2923
        %3114 = vmatpush.bf16.msra.mxu0 %v2917
        %3115 = vmatpush.bf16.msra.mxu0 %v2911
        %3116 = vmatpush.bf16.msra.mxu0 %v2905
        %3117 = vmatpush.bf16.msra.mxu0 %v2899
        %3118 = vmatpush.bf16.msra.mxu0 %v2893
        %3119 = vmatpush.bf16.msra.mxu0 %v2887
        %3120 = vmatpush.bf16.msra.mxu0 %v2881
        %3121 = vmatmul.bf16.gmra.mxu0 %v2539
        %v3122 = vpop.f32.mrf.mxu0
        %v3123 = vadd.f32 %v3110, %v3122
        %v3124 = vpop.f32.mrf.mxu0
        %3125 = vdwg.mxu0
        %3126 = vmatpush.bf16.msra.mxu0 %v2876
        %3127 = vmatpush.bf16.msra.mxu0 %v2870
        %3128 = vmatpush.bf16.msra.mxu0 %v2864
        %3129 = vmatpush.bf16.msra.mxu0 %v2858
        %3130 = vmatpush.bf16.msra.mxu0 %v2852
        %3131 = vmatpush.bf16.msra.mxu0 %v2846
        %3132 = vmatpush.bf16.msra.mxu0 %v2840
        %3133 = vmatpush.bf16.msra.mxu0 %v2834
        %3134 = vmatmul.bf16.gmra.mxu0 %v2536
        %v3135 = vpop.f32.mrf.mxu0
        %v3136 = vadd.f32 0.0, %v3135
        %v3137 = vpop.f32.mrf.mxu0
        %3138 = vdwg.mxu0
        %3139 = vmatpush.bf16.msra.mxu0 %v2924
        %3140 = vmatpush.bf16.msra.mxu0 %v2918
        %3141 = vmatpush.bf16.msra.mxu0 %v2912
        %3142 = vmatpush.bf16.msra.mxu0 %v2906
        %3143 = vmatpush.bf16.msra.mxu0 %v2900
        %3144 = vmatpush.bf16.msra.mxu0 %v2894
        %3145 = vmatpush.bf16.msra.mxu0 %v2888
        %3146 = vmatpush.bf16.msra.mxu0 %v2882
        %3147 = vmatmul.bf16.gmra.mxu0 %v2539
        %v3148 = vpop.f32.mrf.mxu0
        %v3149 = vadd.f32 %v3136, %v3148
        %v3150 = vpop.f32.mrf.mxu0
        %3151 = vdwg.mxu0
        %3152 = vmatpush.bf16.msra.mxu0 %v2877
        %3153 = vmatpush.bf16.msra.mxu0 %v2871
        %3154 = vmatpush.bf16.msra.mxu0 %v2865
        %3155 = vmatpush.bf16.msra.mxu0 %v2859
        %3156 = vmatpush.bf16.msra.mxu0 %v2853
        %3157 = vmatpush.bf16.msra.mxu0 %v2847
        %3158 = vmatpush.bf16.msra.mxu0 %v2841
        %3159 = vmatpush.bf16.msra.mxu0 %v2835
        %3160 = vmatmul.bf16.gmra.mxu0 %v2536
        %v3161 = vpop.f32.mrf.mxu0
        %v3162 = vadd.f32 0.0, %v3161
        %v3163 = vpop.f32.mrf.mxu0
        %3164 = vdwg.mxu0
        %3165 = vmatpush.bf16.msra.mxu0 %v2925
        %3166 = vmatpush.bf16.msra.mxu0 %v2919
        %3167 = vmatpush.bf16.msra.mxu0 %v2913
        %3168 = vmatpush.bf16.msra.mxu0 %v2907
        %3169 = vmatpush.bf16.msra.mxu0 %v2901
        %3170 = vmatpush.bf16.msra.mxu0 %v2895
        %3171 = vmatpush.bf16.msra.mxu0 %v2889
        %3172 = vmatpush.bf16.msra.mxu0 %v2883
        %3173 = vmatmul.bf16.gmra.mxu0 %v2539
        %v3174 = vpop.f32.mrf.mxu0
        %v3175 = vadd.f32 %v3162, %v3174
        %v3176 = vpop.f32.mrf.mxu0
        %3177 = vdwg.mxu0
        %v3178 = vadd.f32 %v2431, %v3045
        %v3179 = vadd.f32 %v2432, %v3071
        %v3180 = vadd.f32 %v2433, %v3097
        %v3181 = vadd.f32 %v2434, %v3123
        %v3182 = vadd.f32 %v2435, %v3149
        %v3183 = vadd.f32 %v2436, %v3175
        %v3184 = vmul.f32 %v3178, %v3178
        %v3185 = vmul.f32 %v3179, %v3179
        %v3186 = vmul.f32 %v3180, %v3180
        %v3187 = vmul.f32 %v3181, %v3181
        %v3188 = vmul.f32 %v3182, %v3182
        %v3189 = vmul.f32 %v3183, %v3183
        %v3190 = vadd.f32 %v3184, %v3187
        %v3191 = vadd.f32 %v3185, %v3188
        %v3192 = vadd.f32 %v3186, %v3189
        %v3193 = vrsqrt.pop %v3190
        %v3194 = vmul.f32 %v3193, %v3190
        %v3195 = vmul.f32 %v3194, %v3193
        %v3196 = vmul.f32 0.5, %v3195
        %v3197 = vsub.f32 1.5, %v3196
        %v3198 = vmul.f32 %v3193, %v3197
        %v3199 = vmul.f32 %v3190, %v3198
        %vm3200 = vcmp.eq.f32.partialorder %v3190, inf
        %v3201 = vsel %vm3200, %v3190, %v3199
        %vm3202 = vcmp.eq.f32.partialorder %v3190, 0.0
        %v3203 = vand.u32 %v3190, 2147483648
        %v3204 = vsel %vm3202, %v3203, %v3201
        %v3205 = vrsqrt.pop %v3191
        %v3206 = vmul.f32 %v3205, %v3191
        %v3207 = vmul.f32 %v3206, %v3205
        %v3208 = vmul.f32 0.5, %v3207
        %v3209 = vsub.f32 1.5, %v3208
        %v3210 = vmul.f32 %v3205, %v3209
        %v3211 = vmul.f32 %v3191, %v3210
        %vm3212 = vcmp.eq.f32.partialorder %v3191, inf
        %v3213 = vsel %vm3212, %v3191, %v3211
        %vm3214 = vcmp.eq.f32.partialorder %v3191, 0.0
        %v3215 = vand.u32 %v3191, 2147483648
        %v3216 = vsel %vm3214, %v3215, %v3213
        %v3217 = vrsqrt.pop %v3192
        %v3218 = vmul.f32 %v3217, %v3192
        %v3219 = vmul.f32 %v3218, %v3217
        %v3220 = vmul.f32 0.5, %v3219
        %v3221 = vsub.f32 1.5, %v3220
        %v3222 = vmul.f32 %v3217, %v3221
        %v3223 = vmul.f32 %v3192, %v3222
        %vm3224 = vcmp.eq.f32.partialorder %v3192, inf
        %v3225 = vsel %vm3224, %v3192, %v3223
        %vm3226 = vcmp.eq.f32.partialorder %v3192, 0.0
        %v3227 = vand.u32 %v3192, 2147483648
        %v3228 = vsel %vm3226, %v3227, %v3225
        %v3229 = vpack.c.bf16 %v3204, %v3204
        %v3230 = vpack.c.bf16 %v3216, %v3216
        %v3231 = vpack.c.bf16 %v3228, %v3228
        %v3232 = vld [vmem:[#allocation5] sm:$0xf]
        %v3233 = vld [vmem:[#allocation5 + $0x4] sm:$0xf]
        %v3234 = vld [vmem:[#allocation5 + $0x8] sm:$0xf]
        %v3235 = vld [vmem:[#allocation5 + $0xc] sm:$0xf]
        %v3236 = vld [vmem:[#allocation5 + $0x10] sm:$0xf]
        %v3237 = vld [vmem:[#allocation5 + $0x14] sm:$0xf]
        %v3238 = vld [vmem:[#allocation5 + $0x18] sm:$0xf]
        %v3239 = vld [vmem:[#allocation5 + $0x1c] sm:$0xf]
        %v3240 = vld [vmem:[#allocation5 + $0x20] sm:$0xf]
        %v3241 = vld [vmem:[#allocation5 + $0x24] sm:$0xf]
        %v3242 = vld [vmem:[#allocation5 + $0x28] sm:$0xf]
        %v3243 = vld [vmem:[#allocation5 + $0x2c] sm:$0xf]
        %v3244 = vld [vmem:[#allocation5 + $0x30] sm:$0xf]
        %v3245 = vld [vmem:[#allocation5 + $0x34] sm:$0xf]
        %v3246 = vld [vmem:[#allocation5 + $0x38] sm:$0xf]
        %v3247 = vld [vmem:[#allocation5 + $0x3c] sm:$0xf]
        %v3248 = vld [vmem:[#allocation5 + $0x40] sm:$0xf]
        %v3249 = vld [vmem:[#allocation5 + $0x44] sm:$0xf]
        %v3250 = vld [vmem:[#allocation5 + $0x48] sm:$0xf]
        %v3251 = vld [vmem:[#allocation5 + $0x4c] sm:$0xf]
        %v3252 = vld [vmem:[#allocation5 + $0x50] sm:$0xf]
        %v3253 = vld [vmem:[#allocation5 + $0x54] sm:$0xf]
        %v3254 = vld [vmem:[#allocation5 + $0x58] sm:$0xf]
        %v3255 = vld [vmem:[#allocation5 + $0x5c] sm:$0xf]
        %v3256 = vld [vmem:[#allocation5 + $0x60] sm:$0xf]
        %v3257 = vld [vmem:[#allocation5 + $0x64] sm:$0xf]
        %v3258 = vld [vmem:[#allocation5 + $0x68] sm:$0xf]
        %v3259 = vld [vmem:[#allocation5 + $0x6c] sm:$0xf]
        %v3260 = vld [vmem:[#allocation5 + $0x70] sm:$0xf]
        %v3261 = vld [vmem:[#allocation5 + $0x74] sm:$0xf]
        %v3262 = vld [vmem:[#allocation5 + $0x78] sm:$0xf]
        %v3263 = vld [vmem:[#allocation5 + $0x7c] sm:$0xf]
        %v3264 = vld [vmem:[#allocation5 + $0x80] sm:$0xf]
        %v3265 = vld [vmem:[#allocation5 + $0x84] sm:$0xf]
        %v3266 = vld [vmem:[#allocation5 + $0x88] sm:$0xf]
        %v3267 = vld [vmem:[#allocation5 + $0x8c] sm:$0xf]
        %v3268 = vld [vmem:[#allocation5 + $0x90] sm:$0xf]
        %v3269 = vld [vmem:[#allocation5 + $0x94] sm:$0xf]
        %v3270 = vld [vmem:[#allocation5 + $0x98] sm:$0xf]
        %v3271 = vld [vmem:[#allocation5 + $0x9c] sm:$0xf]
        %v3272 = vld [vmem:[#allocation5 + $0xa0] sm:$0xf]
        %v3273 = vld [vmem:[#allocation5 + $0xa4] sm:$0xf]
        %v3274 = vld [vmem:[#allocation5 + $0xa8] sm:$0xf]
        %v3275 = vld [vmem:[#allocation5 + $0xac] sm:$0xf]
        %v3276 = vld [vmem:[#allocation5 + $0xb0] sm:$0xf]
        %v3277 = vld [vmem:[#allocation5 + $0xb4] sm:$0xf]
        %v3278 = vld [vmem:[#allocation5 + $0xb8] sm:$0xf]
        %v3279 = vld [vmem:[#allocation5 + $0xbc] sm:$0xf]
        %v3328 = vunpack.c.l.b16 %v3232
        %v3329 = vunpack.c.l.b16 %v3233
        %v3330 = vunpack.c.l.b16 %v3234
        %v3331 = vunpack.c.l.b16 %v3235
        %v3332 = vunpack.c.l.b16 %v3236
        %v3333 = vunpack.c.l.b16 %v3237
        %v3334 = vunpack.c.l.b16 %v3238
        %v3335 = vunpack.c.l.b16 %v3239
        %v3336 = vunpack.c.l.b16 %v3240
        %v3337 = vunpack.c.l.b16 %v3241
        %v3338 = vunpack.c.l.b16 %v3242
        %v3339 = vunpack.c.l.b16 %v3243
        %v3340 = vunpack.c.l.b16 %v3244
        %v3341 = vunpack.c.l.b16 %v3245
        %v3342 = vunpack.c.l.b16 %v3246
        %v3343 = vunpack.c.l.b16 %v3247
        %v3344 = vunpack.c.l.b16 %v3248
        %v3345 = vunpack.c.l.b16 %v3249
        %v3346 = vunpack.c.l.b16 %v3250
        %v3347 = vunpack.c.l.b16 %v3251
        %v3348 = vunpack.c.l.b16 %v3252
        %v3349 = vunpack.c.l.b16 %v3253
        %v3350 = vunpack.c.l.b16 %v3254
        %v3351 = vunpack.c.l.b16 %v3255
        %v3352 = vunpack.c.l.b16 %v3256
        %v3353 = vunpack.c.l.b16 %v3257
        %v3354 = vunpack.c.l.b16 %v3258
        %v3355 = vunpack.c.l.b16 %v3259
        %v3356 = vunpack.c.l.b16 %v3260
        %v3357 = vunpack.c.l.b16 %v3261
        %v3358 = vunpack.c.l.b16 %v3262
        %v3359 = vunpack.c.l.b16 %v3263
        %v3360 = vunpack.c.l.b16 %v3264
        %v3361 = vunpack.c.l.b16 %v3265
        %v3362 = vunpack.c.l.b16 %v3266
        %v3363 = vunpack.c.l.b16 %v3267
        %v3364 = vunpack.c.l.b16 %v3268
        %v3365 = vunpack.c.l.b16 %v3269
        %v3366 = vunpack.c.l.b16 %v3270
        %v3367 = vunpack.c.l.b16 %v3271
        %v3368 = vunpack.c.l.b16 %v3272
        %v3369 = vunpack.c.l.b16 %v3273
        %v3370 = vunpack.c.l.b16 %v3274
        %v3371 = vunpack.c.l.b16 %v3275
        %v3372 = vunpack.c.l.b16 %v3276
        %v3373 = vunpack.c.l.b16 %v3277
        %v3374 = vunpack.c.l.b16 %v3278
        %v3375 = vunpack.c.l.b16 %v3279
        %v3376 = vpack.c.b16 %v3329, %v3328
        %v3377 = vpack.c.b16 %v3331, %v3330
        %v3378 = vpack.c.b16 %v3333, %v3332
        %v3379 = vpack.c.b16 %v3335, %v3334
        %v3380 = vpack.c.b16 %v3337, %v3336
        %v3381 = vpack.c.b16 %v3339, %v3338
        %v3382 = vpack.c.b16 %v3341, %v3340
        %v3383 = vpack.c.b16 %v3343, %v3342
        %v3384 = vpack.c.b16 %v3345, %v3344
        %v3385 = vpack.c.b16 %v3347, %v3346
        %v3386 = vpack.c.b16 %v3349, %v3348
        %v3387 = vpack.c.b16 %v3351, %v3350
        %v3388 = vpack.c.b16 %v3353, %v3352
        %v3389 = vpack.c.b16 %v3355, %v3354
        %v3390 = vpack.c.b16 %v3357, %v3356
        %v3391 = vpack.c.b16 %v3359, %v3358
        %v3392 = vpack.c.b16 %v3361, %v3360
        %v3393 = vpack.c.b16 %v3363, %v3362
        %v3394 = vpack.c.b16 %v3365, %v3364
        %v3395 = vpack.c.b16 %v3367, %v3366
        %v3396 = vpack.c.b16 %v3369, %v3368
        %v3397 = vpack.c.b16 %v3371, %v3370
        %v3398 = vpack.c.b16 %v3373, %v3372
        %v3399 = vpack.c.b16 %v3375, %v3374
        %3424 = vmatpush.bf16.msra.mxu0 %v3383
        %3425 = vmatpush.bf16.msra.mxu0 %v3382
        %3426 = vmatpush.bf16.msra.mxu0 %v3381
        %3427 = vmatpush.bf16.msra.mxu0 %v3380
        %3428 = vmatpush.bf16.msra.mxu0 %v3379
        %3429 = vmatpush.bf16.msra.mxu0 %v3378
        %3430 = vmatpush.bf16.msra.mxu0 %v3377
        %3431 = vmatpush.bf16.msra.mxu0 %v3376
        %3432 = vmatmul.bf16.gmra.mxu0 %v3229
        %v3433 = vpop.f32.mrf.mxu0
        %v3434 = vadd.f32 0.0, %v3433
        %v3435 = vpop.f32.mrf.mxu0
        %3436 = vdwg.mxu0
        %3437 = vmatpush.bf16.msra.mxu0 %v3391
        %3438 = vmatpush.bf16.msra.mxu0 %v3390
        %3439 = vmatpush.bf16.msra.mxu0 %v3389
        %3440 = vmatpush.bf16.msra.mxu0 %v3388
        %3441 = vmatpush.bf16.msra.mxu0 %v3387
        %3442 = vmatpush.bf16.msra.mxu0 %v3386
        %3443 = vmatpush.bf16.msra.mxu0 %v3385
        %3444 = vmatpush.bf16.msra.mxu0 %v3384
        %3445 = vmatmul.bf16.gmra.mxu0 %v3230
        %v3446 = vpop.f32.mrf.mxu0
        %v3447 = vadd.f32 %v3434, %v3446
        %v3448 = vpop.f32.mrf.mxu0
        %3449 = vdwg.mxu0
        %3450 = vmatpush.bf16.msra.mxu0 %v3399
        %3451 = vmatpush.bf16.msra.mxu0 %v3398
        %3452 = vmatpush.bf16.msra.mxu0 %v3397
        %3453 = vmatpush.bf16.msra.mxu0 %v3396
        %3454 = vmatpush.bf16.msra.mxu0 %v3395
        %3455 = vmatpush.bf16.msra.mxu0 %v3394
        %3456 = vmatpush.bf16.msra.mxu0 %v3393
        %3457 = vmatpush.bf16.msra.mxu0 %v3392
        %3458 = vmatmul.bf16.gmra.mxu0 %v3231
        %v3459 = vpop.f32.mrf.mxu0
        %v3460 = vadd.f32 %v3447, %v3459
        %v3461 = vpop.f32.mrf.mxu0
        %3462 = vdwg.mxu0
        %v3463 = vmax.f32 %v3460, 1e-05
        %v3464 = vlog2.pop %v3463
        %v3465 = vmul.f32 %v3464, 0.6931472
        %3466 = vst [vmem:[%s197] sm:$0xff] %v3465
        %s3467 = sand.u32 %s95, 1
        %s3468 = scalar_lea.sflag [#allocation4], %s3467
        %s3469 = sand.u32 %s95, 1
        %s3470 = smul.addr %s3469, 8
        %s3471 = scalar_lea.vmem [#allocation7], %s3470
        // Predicated region
        $region41: #{tpu_custom_call.1} parent=31 // pred_check
          %p3472 = pneg %p105
        $region42: #{tpu_custom_call.1} parent=31 // pred_check_branch
          %3474 = sbr.rel (%p3472) target = $region44
        $region43: #{tpu_custom_call.1} parent=31 // pred_region
          %3476 = vsyncadd %s3468, 0
          %s3477 = smul.addr %s19, 8
          %s3478 = scalar_lea.hbm %s3, %s3477
          %s3480 = sshll.u32 %s3471, 4
          %s3481 = int_to_ptr.vmem [resolvable:$true] %s3480
          %s3482 = sshll.u32 %s3478, 4
          %s3483 = int_to_ptr.hbm [resolvable:$true] %s3482
          %3485 = dma.vmem_to_hbm [thread:$0]  %s3481, 128, %s3483, %s3468
        $region44: #{tpu_custom_call.1} parent=31 // pred_fallthru
          _
      $region32: #{tpu_custom_call.1} parent=5 // pred_fallthru
        _
      %p3486 = scmp.le.s32.totalorder 2, %s14
      // Predicated region
      $region45: #{tpu_custom_call.1} parent=5 // pred_check
        %p3487 = pneg %p3486
      $region46: #{tpu_custom_call.1} parent=5 // pred_check_branch
        %3489 = sbr.rel (%p3487) target = $region48
      $region47: #{tpu_custom_call.1} parent=5 // pred_region
        %s3490 = ssub.s32 %s14, 2
        // Predicated region
        $region49: #{tpu_custom_call.1} parent=47 // pred_check
          %p3491 = pneg %p111
        $region50: #{tpu_custom_call.1} parent=47 // pred_check_branch
          %3493 = sbr.rel (%p3491) target = $region52
        $region51: #{tpu_custom_call.1} parent=47 // pred_region
          %s3494 = sand.u32 %s96, 1
          %s3495 = scalar_lea.sflag [#allocation4], %s3494
          %s3496 = sand.u32 %s96, 1
          %s3497 = smul.addr %s3496, 8
          %s3498 = scalar_lea.vmem [#allocation7], %s3497
          %3500 = dma.done %s3495, 128
        $region52: #{tpu_custom_call.1} parent=47 // pred_fallthru
          _
      $region48: #{tpu_custom_call.1} parent=5 // pred_fallthru
        _
    $region6: #{tpu_custom_call.1} parent=1 // loop_footer
      %s18 = sadd.s32 1, %s14
    $region7: #{tpu_custom_call.1} parent=1 // loop_footer_branch
      %13 = sbr.rel target = $region3
    $region8: #{tpu_custom_call.1} parent=1 // loop_exit
      _
    %3501 = vsyncpa [#allocation3], 1
    %s3502 = scalar_lea.sflag [#allocation3], 1
    %3503 = vsyncpa %s3502, 1
    %3504 = vsyncpa [#allocation6], 1
    %3505 = vsyncpa [#allocation4], 1
    %s3506 = scalar_lea.sflag [#allocation4], 1
    %3507 = vsyncpa %s3506, 1

</llo_original>
